<compile_context>
chip_gen: v6e
topology: v6e:2x2x1
jax: 0.10.0
libtpu: 0.0.40
codegen_flags: <defaults>
</compile_context>

<pallas_src>
import functools

import jax
import jax.numpy as jnp
from jax import lax
from jax.experimental import pallas as pl
from jax.experimental.pallas import tpu as pltpu

NEG_INF = -1e30
LEAKY_ALPHA = 0.2
NUM_LAYERS = 4


# ---------------------------------------------------------------------------
# Fused Pallas kernel: whole batch, all 4 layers, residual + tanh + mean.
# Everything stays in VMEM / vregs; the only HBM write is the final (B, H).
# ---------------------------------------------------------------------------
def _job_encoder_kernel(feat_ref, bias_ref, w_ref, mean_ref, out_ref, *, hidden):
    """feat_ref : (B*N, F_pad)   batch-stacked, zero-padded node features
       bias_ref : (B*N, B*N)     block-diagonal additive attention bias (0 / -1e30)
       w_ref    : (L, F_pad, H+2) augmented weights [W | W a_src | W a_dst]
       mean_ref : (B, B*N)       per-batch averaging matrix (1/N on block diag)
       out_ref  : (B, H)
    """
    H = hidden
    bias = bias_ref[...]                                   # (BN, BN)
    h = feat_ref[...]                                      # (BN, F_pad)
    bn = h.shape[0]
    f_pad = h.shape[1]
    ones_col = jnp.ones((bn, 1), jnp.float32)              # hoisted out of the loop

    prev = None
    for i in range(w_ref.shape[0]):                        # statically unrolled
        w = w_ref[i] if (i == 0 or H == f_pad) else w_ref[i, :H, :]

        # One MXU dot gives the transformed features AND both attention terms.
        z_aug = jnp.dot(h, w, preferred_element_type=jnp.float32)       # (BN, H+2)
        z = z_aug[:, :H]                                                # (BN, H)
        e_src = z_aug[:, H:H + 1]                                       # (BN, 1)
        e_dst = z_aug[:, H + 1:H + 2]                                   # (BN, 1)

        # e[i, j] = e_src[i] + e_dst[j]; the column -> row broadcast is a K=1
        # MXU outer product (cheap; avoids an XLU transpose).
        e = e_src + lax.dot_general(ones_col, e_dst, (((1,), (1,)), ((), ())),
                                    preferred_element_type=jnp.float32)  # (BN, BN)

        # LeakyReLU(0.2), adjacency / cross-batch mask, softmax over neighbours.
        e = jnp.where(e > 0, e, LEAKY_ALPHA * e) + bias
        m = jnp.max(e, axis=-1, keepdims=True)
        p = jnp.exp(e - m)
        denom = jnp.sum(p, axis=-1, keepdims=True)
        attn = p * pl.reciprocal(denom, approx=True)

        # Aggregate (MXU) + residual (layers 1..3) + tanh (EUP).
        h_new = jnp.dot(attn, z, preferred_element_type=jnp.float32)    # (BN, H)
        if i != 0:
            h_new = h_new + prev
        h = jnp.tanh(h_new)
        prev = h

    # Per-batch node mean as one tiny MXU dot; single (B, H) store.
    out_ref[...] = jnp.dot(mean_ref[...], h, preferred_element_type=jnp.float32)


# ---------------------------------------------------------------------------
# Wrapper: host-side packing (done once, outside the kernel) + pallas_call.
# ---------------------------------------------------------------------------
def job_encoder_forward(adjacency, feature, mask, params):
    """Pallas implementation of Job_encoder.forward (single fused invocation)."""
    del mask  # unused in the reference forward
    B, N, f_in = feature.shape
    H = params[0]["w"].shape[-1]
    BN = B * N
    f_pad = max(f_in, H)

    # (1) Fold attention vectors into each layer's weight: [W | W a_src | W a_dst],
    #     zero-pad rows to f_pad, stack all layers into one slab.
    slabs = []
    for p in params:
        w = p["w"].astype(jnp.float32)                      # (rows, H)
        a = p["a"].astype(jnp.float32)                      # (2, H)
        w_aug = jnp.concatenate([w, w @ a[0][:, None], w @ a[1][:, None]], axis=1)
        if w_aug.shape[0] < f_pad:
            w_aug = jnp.pad(w_aug, ((0, f_pad - w_aug.shape[0]), (0, 0)))
        slabs.append(w_aug)
    w_slab = jnp.stack(slabs, axis=0)                       # (L, f_pad, H+2)

    # (2) Stack the batch along sublanes; zero-pad feature columns to f_pad.
    feat = feature.reshape(BN, f_in).astype(jnp.float32)
    if f_in < f_pad:
        feat = jnp.pad(feat, ((0, 0), (0, f_pad - f_in)))   # (BN, f_pad)

    # (3) Block-diagonal additive attention bias (cross-batch entries = -1e30).
    bias_blk = jnp.where(adjacency > 0, 0.0, NEG_INF).astype(jnp.float32)  # (B,N,N)
    same_b = jnp.eye(B, dtype=bool)[:, None, :, None]                      # (B,1,B,1)
    bias = jnp.where(same_b, bias_blk[:, :, None, :], NEG_INF)             # (B,N,B,N)
    bias = bias.reshape(BN, BN)

    # (4) Per-batch averaging matrix for the node mean.
    mean_mat = (jnp.eye(B, dtype=jnp.float32)[:, :, None]
                * jnp.full((N,), 1.0 / N, jnp.float32)).reshape(B, BN)     # (B, BN)

    vmem = pl.BlockSpec(memory_space=pltpu.MemorySpace.VMEM)
    out = pl.pallas_call(
        functools.partial(_job_encoder_kernel, hidden=H),
        out_shape=jax.ShapeDtypeStruct((B, H), jnp.float32),
        in_specs=[vmem, vmem, vmem, vmem],
        out_specs=vmem,
    )(feat, bias, w_slab, mean_mat)
    return out                                              # (B, H)


# ---------------------------------------------------------------------------
# Pure-JAX reference (same math) for a sanity check.
# ---------------------------------------------------------------------------
def reference_forward(adjacency, feature, mask, params):
    del mask
    out = feature
    prev = None
    for i, p in enumerate(params):
        z = jnp.einsum("bnf,fh->bnh", out, p["w"])
        e_src = jnp.sum(z * p["a"][0], axis=-1, keepdims=True)        # (B,N,1)
        e_dst = jnp.sum(z * p["a"][1], axis=-1, keepdims=True)        # (B,N,1)
        e = e_src + jnp.swapaxes(e_dst, -1, -2)                       # (B,N,N)
        e = jnp.where(e > 0, e, LEAKY_ALPHA * e)
        e = jnp.where(adjacency > 0, e, NEG_INF)
        attn = jax.nn.softmax(e, axis=-1)
        h_new = jnp.einsum("bij,bjh->bih", attn, z)
        if i != 0:
            h_new = h_new + prev
        out = jnp.tanh(h_new)
        prev = out
    return jnp.mean(out, axis=-2)


# ---------------------------------------------------------------------------
if __name__ == "__main__":
    par = {"layer_num": 4, "job feature": 16, "job hidden": 32}
    B, N = 2, 8
    F_in, H = par["job feature"], par["job hidden"]

    key = jax.random.PRNGKey(0)
    k_feat, k_adj, *k_params = jax.random.split(key, 2 + 2 * NUM_LAYERS)

    # Deterministic parameter init (Xavier-style), 4 GAT layers.
    params = []
    in_dim = F_in
    for i in range(NUM_LAYERS):
        kw, ka = k_params[2 * i], k_params[2 * i + 1]
        w = jax.random.normal(kw, (in_dim, H), jnp.float32) * jnp.sqrt(
            2.0 / (in_dim + H))
        a = jax.random.normal(ka, (2, H), jnp.float32) * jnp.sqrt(2.0 / (2 * H + 1))
        params.append({"w": w, "a": a})
        in_dim = H

    # Inputs: random features, random symmetric binary adjacency with self-loops.
    feature = jax.random.normal(k_feat, (B, N, F_in), jnp.float32)
    rand_adj = (jax.random.uniform(k_adj, (B, N, N)) > 0.5).astype(jnp.float32)
    adjacency = jnp.maximum(rand_adj, jnp.swapaxes(rand_adj, -1, -2))
    adjacency = jnp.maximum(adjacency, jnp.eye(N, dtype=jnp.float32)[None])
    mask = jnp.ones((B, N), jnp.float32)  # unused, kept for signature fidelity

    out = job_encoder_forward(adjacency, feature, mask, params)
    out = jax.block_until_ready(out)

    ref = reference_forward(adjacency, feature, mask, params)
    assert out.shape == (B, H), out.shape
    assert jnp.all(jnp.isfinite(out))
    assert jnp.allclose(out, ref, atol=2e-2, rtol=2e-2), (
        "mismatch vs reference: max abs err "
        f"{float(jnp.max(jnp.abs(out - ref)))}")

    print("KERNEL_OK")
</pallas_src>

<mosaic_0001>
module attributes {stable_mosaic.version = 11 : i64} {
  func.func @_job_encoder_kernel(%arg0: memref<16x32xf32, #tpu.memory_space<vmem>>, %arg1: memref<16x16xf32, #tpu.memory_space<vmem>>, %arg2: memref<4x32x34xf32, #tpu.memory_space<vmem>>, %arg3: memref<2x16xf32, #tpu.memory_space<vmem>>, %arg4: memref<2x32xf32, #tpu.memory_space<vmem>>) attributes {dimension_semantics = [], scalar_prefetch = 0 : i64, scratch_operands = 0 : i64, tpu.core_type = #tpu.core_type<tc>} {
    %c0 = arith.constant 0 : index
    %c0_0 = arith.constant 0 : index
    %0 = vector.load %arg1[%c0, %c0_0] : memref<16x16xf32, #tpu.memory_space<vmem>>, vector<16x16xf32>
    %c0_1 = arith.constant 0 : index
    %c0_2 = arith.constant 0 : index
    %1 = vector.load %arg0[%c0_1, %c0_2] : memref<16x32xf32, #tpu.memory_space<vmem>>, vector<16x32xf32>
    %cst = arith.constant 1.000000e+00 : f32
    %2 = vector.broadcast %cst : f32 to vector<16x1xf32>
    %c0_3 = arith.constant 0 : index
    %c0_4 = arith.constant 0 : index
    %c0_5 = arith.constant 0 : index
    %3 = vector.load %arg2[%c0_3, %c0_4, %c0_5] : memref<4x32x34xf32, #tpu.memory_space<vmem>>, vector<1x32x34xf32>
    %4 = vector.shape_cast %3 : vector<1x32x34xf32> to vector<32x34xf32>
    %cst_6 = arith.constant dense<0.000000e+00> : vector<16x34xf32>
    %5 = tpu.matmul %1, %4, %cst_6 {dimension_numbers = #tpu.dot_dimension_numbers<[1], [0], [0], [1], [0, 0, 1, 1], [], []>} : vector<16x32xf32>, vector<32x34xf32>, vector<16x34xf32> -> vector<16x34xf32>
    %6 = vector.extract_strided_slice %5 {offsets = [0, 0], sizes = [16, 32], strides = [1, 1]} : vector<16x34xf32> to vector<16x32xf32>
    %7 = vector.extract_strided_slice %5 {offsets = [0, 32], sizes = [16, 1], strides = [1, 1]} : vector<16x34xf32> to vector<16x1xf32>
    %8 = vector.extract_strided_slice %5 {offsets = [0, 33], sizes = [16, 1], strides = [1, 1]} : vector<16x34xf32> to vector<16x1xf32>
    %cst_7 = arith.constant dense<0.000000e+00> : vector<16x16xf32>
    %9 = tpu.matmul %2, %8, %cst_7 {dimension_numbers = #tpu.dot_dimension_numbers<[1], [1], [0], [0], [0, 0, 1, 0], [], []>} : vector<16x1xf32>, vector<16x1xf32>, vector<16x16xf32> -> vector<16x16xf32>
    %10 = vector.broadcast %7 : vector<16x1xf32> to vector<16x16xf32>
    %11 = arith.addf %10, %9 : vector<16x16xf32>
    %cst_8 = arith.constant 0.000000e+00 : f32
    %12 = vector.broadcast %cst_8 : f32 to vector<16x16xf32>
    %13 = arith.cmpf ogt, %11, %12 : vector<16x16xf32>
    %cst_9 = arith.constant 2.000000e-01 : f32
    %14 = vector.broadcast %cst_9 : f32 to vector<16x16xf32>
    %15 = arith.mulf %14, %11 : vector<16x16xf32>
    %16 = arith.select %13, %11, %15 : vector<16x16xi1>, vector<16x16xf32>
    %17 = arith.addf %16, %0 : vector<16x16xf32>
    %cst_10 = arith.constant dense<0xFF800000> : vector<16xf32>
    %18 = vector.multi_reduction <maximumf>, %17, %cst_10 [1] : vector<16x16xf32> to vector<16xf32>
    %19 = vector.shape_cast %18 : vector<16xf32> to vector<16x1xf32>
    %20 = vector.broadcast %19 : vector<16x1xf32> to vector<16x16xf32>
    %21 = arith.subf %17, %20 : vector<16x16xf32>
    %22 = math.exp %21 : vector<16x16xf32>
    %cst_11 = arith.constant dense<0.000000e+00> : vector<16xf32>
    %23 = vector.multi_reduction <add>, %22, %cst_11 [1] : vector<16x16xf32> to vector<16xf32>
    %24 = vector.shape_cast %23 : vector<16xf32> to vector<16x1xf32>
    %25 = tpu.reciprocal %24 {approx = true} : vector<16x1xf32> -> vector<16x1xf32>
    %26 = vector.broadcast %25 : vector<16x1xf32> to vector<16x16xf32>
    %27 = arith.mulf %22, %26 : vector<16x16xf32>
    %cst_12 = arith.constant dense<0.000000e+00> : vector<16x32xf32>
    %28 = tpu.matmul %27, %6, %cst_12 {dimension_numbers = #tpu.dot_dimension_numbers<[1], [0], [0], [1], [0, 0, 1, 1], [], []>} : vector<16x16xf32>, vector<16x32xf32>, vector<16x32xf32> -> vector<16x32xf32>
    %29 = math.tanh %28 : vector<16x32xf32>
    %c1 = arith.constant 1 : index
    %c0_13 = arith.constant 0 : index
    %c0_14 = arith.constant 0 : index
    %30 = vector.load %arg2[%c1, %c0_13, %c0_14] : memref<4x32x34xf32, #tpu.memory_space<vmem>>, vector<1x32x34xf32>
    %31 = vector.shape_cast %30 : vector<1x32x34xf32> to vector<32x34xf32>
    %cst_15 = arith.constant dense<0.000000e+00> : vector<16x34xf32>
    %32 = tpu.matmul %29, %31, %cst_15 {dimension_numbers = #tpu.dot_dimension_numbers<[1], [0], [0], [1], [0, 0, 1, 1], [], []>} : vector<16x32xf32>, vector<32x34xf32>, vector<16x34xf32> -> vector<16x34xf32>
    %33 = vector.extract_strided_slice %32 {offsets = [0, 0], sizes = [16, 32], strides = [1, 1]} : vector<16x34xf32> to vector<16x32xf32>
    %34 = vector.extract_strided_slice %32 {offsets = [0, 32], sizes = [16, 1], strides = [1, 1]} : vector<16x34xf32> to vector<16x1xf32>
    %35 = vector.extract_strided_slice %32 {offsets = [0, 33], sizes = [16, 1], strides = [1, 1]} : vector<16x34xf32> to vector<16x1xf32>
    %cst_16 = arith.constant dense<0.000000e+00> : vector<16x16xf32>
    %36 = tpu.matmul %2, %35, %cst_16 {dimension_numbers = #tpu.dot_dimension_numbers<[1], [1], [0], [0], [0, 0, 1, 0], [], []>} : vector<16x1xf32>, vector<16x1xf32>, vector<16x16xf32> -> vector<16x16xf32>
    %37 = vector.broadcast %34 : vector<16x1xf32> to vector<16x16xf32>
    %38 = arith.addf %37, %36 : vector<16x16xf32>
    %cst_17 = arith.constant 0.000000e+00 : f32
    %39 = vector.broadcast %cst_17 : f32 to vector<16x16xf32>
    %40 = arith.cmpf ogt, %38, %39 : vector<16x16xf32>
    %cst_18 = arith.constant 2.000000e-01 : f32
    %41 = vector.broadcast %cst_18 : f32 to vector<16x16xf32>
    %42 = arith.mulf %41, %38 : vector<16x16xf32>
    %43 = arith.select %40, %38, %42 : vector<16x16xi1>, vector<16x16xf32>
    %44 = arith.addf %43, %0 : vector<16x16xf32>
    %cst_19 = arith.constant dense<0xFF800000> : vector<16xf32>
    %45 = vector.multi_reduction <maximumf>, %44, %cst_19 [1] : vector<16x16xf32> to vector<16xf32>
    %46 = vector.shape_cast %45 : vector<16xf32> to vector<16x1xf32>
    %47 = vector.broadcast %46 : vector<16x1xf32> to vector<16x16xf32>
    %48 = arith.subf %44, %47 : vector<16x16xf32>
    %49 = math.exp %48 : vector<16x16xf32>
    %cst_20 = arith.constant dense<0.000000e+00> : vector<16xf32>
    %50 = vector.multi_reduction <add>, %49, %cst_20 [1] : vector<16x16xf32> to vector<16xf32>
    %51 = vector.shape_cast %50 : vector<16xf32> to vector<16x1xf32>
    %52 = tpu.reciprocal %51 {approx = true} : vector<16x1xf32> -> vector<16x1xf32>
    %53 = vector.broadcast %52 : vector<16x1xf32> to vector<16x16xf32>
    %54 = arith.mulf %49, %53 : vector<16x16xf32>
    %cst_21 = arith.constant dense<0.000000e+00> : vector<16x32xf32>
    %55 = tpu.matmul %54, %33, %cst_21 {dimension_numbers = #tpu.dot_dimension_numbers<[1], [0], [0], [1], [0, 0, 1, 1], [], []>} : vector<16x16xf32>, vector<16x32xf32>, vector<16x32xf32> -> vector<16x32xf32>
    %56 = arith.addf %55, %29 : vector<16x32xf32>
    %57 = math.tanh %56 : vector<16x32xf32>
    %c2 = arith.constant 2 : index
    %c0_22 = arith.constant 0 : index
    %c0_23 = arith.constant 0 : index
    %58 = vector.load %arg2[%c2, %c0_22, %c0_23] : memref<4x32x34xf32, #tpu.memory_space<vmem>>, vector<1x32x34xf32>
    %59 = vector.shape_cast %58 : vector<1x32x34xf32> to vector<32x34xf32>
    %cst_24 = arith.constant dense<0.000000e+00> : vector<16x34xf32>
    %60 = tpu.matmul %57, %59, %cst_24 {dimension_numbers = #tpu.dot_dimension_numbers<[1], [0], [0], [1], [0, 0, 1, 1], [], []>} : vector<16x32xf32>, vector<32x34xf32>, vector<16x34xf32> -> vector<16x34xf32>
    %61 = vector.extract_strided_slice %60 {offsets = [0, 0], sizes = [16, 32], strides = [1, 1]} : vector<16x34xf32> to vector<16x32xf32>
    %62 = vector.extract_strided_slice %60 {offsets = [0, 32], sizes = [16, 1], strides = [1, 1]} : vector<16x34xf32> to vector<16x1xf32>
    %63 = vector.extract_strided_slice %60 {offsets = [0, 33], sizes = [16, 1], strides = [1, 1]} : vector<16x34xf32> to vector<16x1xf32>
    %cst_25 = arith.constant dense<0.000000e+00> : vector<16x16xf32>
    %64 = tpu.matmul %2, %63, %cst_25 {dimension_numbers = #tpu.dot_dimension_numbers<[1], [1], [0], [0], [0, 0, 1, 0], [], []>} : vector<16x1xf32>, vector<16x1xf32>, vector<16x16xf32> -> vector<16x16xf32>
    %65 = vector.broadcast %62 : vector<16x1xf32> to vector<16x16xf32>
    %66 = arith.addf %65, %64 : vector<16x16xf32>
    %cst_26 = arith.constant 0.000000e+00 : f32
    %67 = vector.broadcast %cst_26 : f32 to vector<16x16xf32>
    %68 = arith.cmpf ogt, %66, %67 : vector<16x16xf32>
    %cst_27 = arith.constant 2.000000e-01 : f32
    %69 = vector.broadcast %cst_27 : f32 to vector<16x16xf32>
    %70 = arith.mulf %69, %66 : vector<16x16xf32>
    %71 = arith.select %68, %66, %70 : vector<16x16xi1>, vector<16x16xf32>
    %72 = arith.addf %71, %0 : vector<16x16xf32>
    %cst_28 = arith.constant dense<0xFF800000> : vector<16xf32>
    %73 = vector.multi_reduction <maximumf>, %72, %cst_28 [1] : vector<16x16xf32> to vector<16xf32>
    %74 = vector.shape_cast %73 : vector<16xf32> to vector<16x1xf32>
    %75 = vector.broadcast %74 : vector<16x1xf32> to vector<16x16xf32>
    %76 = arith.subf %72, %75 : vector<16x16xf32>
    %77 = math.exp %76 : vector<16x16xf32>
    %cst_29 = arith.constant dense<0.000000e+00> : vector<16xf32>
    %78 = vector.multi_reduction <add>, %77, %cst_29 [1] : vector<16x16xf32> to vector<16xf32>
    %79 = vector.shape_cast %78 : vector<16xf32> to vector<16x1xf32>
    %80 = tpu.reciprocal %79 {approx = true} : vector<16x1xf32> -> vector<16x1xf32>
    %81 = vector.broadcast %80 : vector<16x1xf32> to vector<16x16xf32>
    %82 = arith.mulf %77, %81 : vector<16x16xf32>
    %cst_30 = arith.constant dense<0.000000e+00> : vector<16x32xf32>
    %83 = tpu.matmul %82, %61, %cst_30 {dimension_numbers = #tpu.dot_dimension_numbers<[1], [0], [0], [1], [0, 0, 1, 1], [], []>} : vector<16x16xf32>, vector<16x32xf32>, vector<16x32xf32> -> vector<16x32xf32>
    %84 = arith.addf %83, %57 : vector<16x32xf32>
    %85 = math.tanh %84 : vector<16x32xf32>
    %c3 = arith.constant 3 : index
    %c0_31 = arith.constant 0 : index
    %c0_32 = arith.constant 0 : index
    %86 = vector.load %arg2[%c3, %c0_31, %c0_32] : memref<4x32x34xf32, #tpu.memory_space<vmem>>, vector<1x32x34xf32>
    %87 = vector.shape_cast %86 : vector<1x32x34xf32> to vector<32x34xf32>
    %cst_33 = arith.constant dense<0.000000e+00> : vector<16x34xf32>
    %88 = tpu.matmul %85, %87, %cst_33 {dimension_numbers = #tpu.dot_dimension_numbers<[1], [0], [0], [1], [0, 0, 1, 1], [], []>} : vector<16x32xf32>, vector<32x34xf32>, vector<16x34xf32> -> vector<16x34xf32>
    %89 = vector.extract_strided_slice %88 {offsets = [0, 0], sizes = [16, 32], strides = [1, 1]} : vector<16x34xf32> to vector<16x32xf32>
    %90 = vector.extract_strided_slice %88 {offsets = [0, 32], sizes = [16, 1], strides = [1, 1]} : vector<16x34xf32> to vector<16x1xf32>
    %91 = vector.extract_strided_slice %88 {offsets = [0, 33], sizes = [16, 1], strides = [1, 1]} : vector<16x34xf32> to vector<16x1xf32>
    %cst_34 = arith.constant dense<0.000000e+00> : vector<16x16xf32>
    %92 = tpu.matmul %2, %91, %cst_34 {dimension_numbers = #tpu.dot_dimension_numbers<[1], [1], [0], [0], [0, 0, 1, 0], [], []>} : vector<16x1xf32>, vector<16x1xf32>, vector<16x16xf32> -> vector<16x16xf32>
    %93 = vector.broadcast %90 : vector<16x1xf32> to vector<16x16xf32>
    %94 = arith.addf %93, %92 : vector<16x16xf32>
    %cst_35 = arith.constant 0.000000e+00 : f32
    %95 = vector.broadcast %cst_35 : f32 to vector<16x16xf32>
    %96 = arith.cmpf ogt, %94, %95 : vector<16x16xf32>
    %cst_36 = arith.constant 2.000000e-01 : f32
    %97 = vector.broadcast %cst_36 : f32 to vector<16x16xf32>
    %98 = arith.mulf %97, %94 : vector<16x16xf32>
    %99 = arith.select %96, %94, %98 : vector<16x16xi1>, vector<16x16xf32>
    %100 = arith.addf %99, %0 : vector<16x16xf32>
    %cst_37 = arith.constant dense<0xFF800000> : vector<16xf32>
    %101 = vector.multi_reduction <maximumf>, %100, %cst_37 [1] : vector<16x16xf32> to vector<16xf32>
    %102 = vector.shape_cast %101 : vector<16xf32> to vector<16x1xf32>
    %103 = vector.broadcast %102 : vector<16x1xf32> to vector<16x16xf32>
    %104 = arith.subf %100, %103 : vector<16x16xf32>
    %105 = math.exp %104 : vector<16x16xf32>
    %cst_38 = arith.constant dense<0.000000e+00> : vector<16xf32>
    %106 = vector.multi_reduction <add>, %105, %cst_38 [1] : vector<16x16xf32> to vector<16xf32>
    %107 = vector.shape_cast %106 : vector<16xf32> to vector<16x1xf32>
    %108 = tpu.reciprocal %107 {approx = true} : vector<16x1xf32> -> vector<16x1xf32>
    %109 = vector.broadcast %108 : vector<16x1xf32> to vector<16x16xf32>
    %110 = arith.mulf %105, %109 : vector<16x16xf32>
    %cst_39 = arith.constant dense<0.000000e+00> : vector<16x32xf32>
    %111 = tpu.matmul %110, %89, %cst_39 {dimension_numbers = #tpu.dot_dimension_numbers<[1], [0], [0], [1], [0, 0, 1, 1], [], []>} : vector<16x16xf32>, vector<16x32xf32>, vector<16x32xf32> -> vector<16x32xf32>
    %112 = arith.addf %111, %85 : vector<16x32xf32>
    %113 = math.tanh %112 : vector<16x32xf32>
    %c0_40 = arith.constant 0 : index
    %c0_41 = arith.constant 0 : index
    %114 = vector.load %arg3[%c0_40, %c0_41] : memref<2x16xf32, #tpu.memory_space<vmem>>, vector<2x16xf32>
    %cst_42 = arith.constant dense<0.000000e+00> : vector<2x32xf32>
    %115 = tpu.matmul %114, %113, %cst_42 {dimension_numbers = #tpu.dot_dimension_numbers<[1], [0], [0], [1], [0, 0, 1, 1], [], []>} : vector<2x16xf32>, vector<16x32xf32>, vector<2x32xf32> -> vector<2x32xf32>
    %c0_43 = arith.constant 0 : index
    %c0_44 = arith.constant 0 : index
    %116 = vector.load %arg4[%c0_43, %c0_44] : memref<2x32xf32, #tpu.memory_space<vmem>>, vector<2x32xf32>
    tpu.vector_store %arg4[%c0_43, %c0_44], %115 {strides = array<i32>} : memref<2x32xf32, #tpu.memory_space<vmem>>, vector<2x32xf32>,
    return
  }
}

</mosaic_0001>

<llo_original>
// kernel: tpu_custom_call.1
$region0: #{tpu_custom_call.1}
  #allocation0 [shape = 'u32[]', space=smem, size = 0x4, offset = 0x4, fixed_abs, tag = 'smem constant byte address 0x4 - core index']
  #allocation1 [shape = 'u32[144,128]{1,0:T(1,128)}', space=vmem, size = 0x12000, scoped, tag = 'internal scratch']
  %s0 = inlined_call_operand.hbm [shape: f32[16,32], index: 0, kind: input, shape index: {}]
  %s1 = inlined_call_operand.hbm [shape: f32[16,16], index: 1, kind: input, shape index: {}]
  %s2 = inlined_call_operand.hbm [shape: f32[4,32,34], index: 2, kind: input, shape index: {}]
  %s3 = inlined_call_operand.vmem [shape: f32[2,16], index: 3, kind: input, shape index: {}]
  %s4 = inlined_call_operand.hbm [shape: f32[2,32], index: 4, kind: output, shape index: {}]
  %s5 = sld [smem:[#allocation0]]
  $region38: #{tpu_custom_call.1} parent=0
    _
  %s7 = ssub.s32 1, %s5
  %s8 = scalar_select 0, %s7, %s5
  $region1: #{tpu_custom_call.1} parent=0
    #allocation2 [shape = 'u8[8192]{0}', space=vmem, size = 0x2000, scoped, tag = 'input window, operand 0, single buffered']
    #allocation3 [shape = 's32[1]{0}', space=sflag, size = 0x4, scoped, tag = 'scoped memory for tpu_custom_call.1']
    #allocation4 [shape = 's32[1]{0}', space=sflag, size = 0x4, scoped, tag = 'scoped memory for tpu_custom_call.1']
    #allocation5 [shape = 'u8[8192]{0}', space=vmem, size = 0x2000, scoped, tag = 'input window, operand 1, single buffered']
    #allocation6 [shape = 's32[1]{0}', space=sflag, size = 0x4, scoped, tag = 'scoped memory for tpu_custom_call.1']
    #allocation7 [shape = 'u8[65536]{0}', space=vmem, size = 0x10000, scoped, tag = 'input window, operand 2, single buffered']
    #allocation8 [shape = 'u8[1024]{0}', space=vmem, size = 0x400, scoped, tag = 'output window, operand 0, single buffered']
    %9 = vsyncpa [#allocation3], 0
    %10 = vsyncpa [#allocation6], 0
    %11 = vsyncpa [#allocation4], 0
    // Predicated region
    $region2: #{tpu_custom_call.1} parent=1 // pred_check
      _
    $region3: #{tpu_custom_call.1} parent=1 // pred_check_branch
      %13 = sbr.rel (0) target = $region5
    $region4: #{tpu_custom_call.1} parent=1 // pred_region
      %s15 = ssub.s32 256, 256
      %16 = vsyncadd [#allocation3], %s15
      %s17 = sshll.u32 [#allocation2], 4
      %s18 = int_to_ptr.vmem [resolvable:$true] %s17
      %23 = dma.hbm_to_vmem [thread:$0]  %s0, 256, %s18, [#allocation3], 128, 128, 8
    $region5: #{tpu_custom_call.1} parent=1 // pred_fallthru
      _
    // Predicated region
    $region6: #{tpu_custom_call.1} parent=1 // pred_check
      _
    $region7: #{tpu_custom_call.1} parent=1 // pred_check_branch
      %25 = sbr.rel (0) target = $region9
    $region8: #{tpu_custom_call.1} parent=1 // pred_region
      %s27 = ssub.s32 256, 256
      %28 = vsyncadd [#allocation6], %s27
      %s29 = sshll.u32 [#allocation5], 4
      %s30 = int_to_ptr.vmem [resolvable:$true] %s29
      %35 = dma.hbm_to_vmem [thread:$0]  %s1, 256, %s30, [#allocation6], 128, 128, 8
    $region9: #{tpu_custom_call.1} parent=1 // pred_fallthru
      _
    // Predicated region
    $region10: #{tpu_custom_call.1} parent=1 // pred_check
      _
    $region11: #{tpu_custom_call.1} parent=1 // pred_check_branch
      %37 = sbr.rel (0) target = $region13
    $region12: #{tpu_custom_call.1} parent=1 // pred_region
      %s39 = ssub.s32 2048, 2048
      %40 = vsyncadd [#allocation6], %s39
      %s41 = sshll.u32 [#allocation7], 4
      %s42 = int_to_ptr.vmem [resolvable:$true] %s41
      %47 = dma.hbm_to_vmem [thread:$0]  %s2, 2048, %s42, [#allocation6], 128, 128, 8
    $region13: #{tpu_custom_call.1} parent=1 // pred_fallthru
      _
    // Predicated region
    $region14: #{tpu_custom_call.1} parent=1 // pred_check
      _
    $region15: #{tpu_custom_call.1} parent=1 // pred_check_branch
      %49 = sbr.rel (0) target = $region17
    $region16: #{tpu_custom_call.1} parent=1 // pred_region
      _
    $region17: #{tpu_custom_call.1} parent=1 // pred_fallthru
      _
    // Predicated region
    $region18: #{tpu_custom_call.1} parent=1 // pred_check
      _
    $region19: #{tpu_custom_call.1} parent=1 // pred_check_branch
      %51 = sbr.rel (0) target = $region21
    $region20: #{tpu_custom_call.1} parent=1 // pred_region
      %52 = dma.done [#allocation3], 256
    $region21: #{tpu_custom_call.1} parent=1 // pred_fallthru
      _
    // Predicated region
    $region22: #{tpu_custom_call.1} parent=1 // pred_check
      _
    $region23: #{tpu_custom_call.1} parent=1 // pred_check_branch
      %54 = sbr.rel (0) target = $region25
    $region24: #{tpu_custom_call.1} parent=1 // pred_region
      %55 = dma.done [#allocation6], 256
    $region25: #{tpu_custom_call.1} parent=1 // pred_fallthru
      _
    // Predicated region
    $region26: #{tpu_custom_call.1} parent=1 // pred_check
      _
    $region27: #{tpu_custom_call.1} parent=1 // pred_check_branch
      %57 = sbr.rel (0) target = $region29
    $region28: #{tpu_custom_call.1} parent=1 // pred_region
      %58 = dma.done [#allocation6], 2048
    $region29: #{tpu_custom_call.1} parent=1 // pred_fallthru
      _
    %v59 = vld [vmem:[#allocation5] sm:$0xff]
    %v60 = vld [vmem:[#allocation5 + $0x8] sm:$0xff]
    %v61 = vld [vmem:[#allocation2] sm:$0xff]
    %v62 = vld [vmem:[#allocation2 + $0x8] sm:$0xff]
    %v63 = vld [vmem:[#allocation7] sm:$0xff]
    %v64 = vld [vmem:[#allocation7 + $0x8] sm:$0xff]
    %v65 = vld [vmem:[#allocation7 + $0x10] sm:$0xff]
    %v66 = vld [vmem:[#allocation7 + $0x18] sm:$0xff]
    %vm67 = vcmask 261120
    %v69 = vsel %vm67, %v61, 0
    %v72 = vsel %vm67, %v62, 0
    %74 = vmatprep.subr.mxu0 0.0
    %75 = vmatpush1.msra.mxu0 0.0
    %76 = vmatprep.subr.mxu0 0.0
    %77 = vmatpush1.msra.mxu0 0.0
    %78 = vmatprep.subr.mxu0 0.0
    %79 = vmatpush1.msra.mxu0 0.0
    %80 = vmatprep.subr.mxu0 0.0
    %81 = vmatpush1.msra.mxu0 0.0
    %82 = vmatprep.subr.mxu0 0.0
    %83 = vmatpush1.msra.mxu0 0.0
    %84 = vmatprep.subr.mxu0 0.0
    %85 = vmatpush1.msra.mxu0 0.0
    %86 = vmatprep.subr.mxu0 0.0
    %87 = vmatpush1.msra.mxu0 0.0
    %88 = vmatprep.subr.mxu0 0.0
    %89 = vmatpush1.msra.mxu0 0.0
    %90 = vmatprep.subr.mxu0 0.0
    %91 = vmatpush1.msra.mxu0 0.0
    %92 = vmatprep.subr.mxu0 0.0
    %93 = vmatpush1.msra.mxu0 0.0
    %94 = vmatprep.subr.mxu0 0.0
    %95 = vmatpush1.msra.mxu0 0.0
    %96 = vmatprep.subr.mxu0 0.0
    %97 = vmatpush1.msra.mxu0 0.0
    %98 = vmatprep.subr.mxu0 0.0
    %99 = vmatpush1.msra.mxu0 %v66
    %100 = vmatprep.subr.mxu0 0.0
    %101 = vmatpush1.msra.mxu0 %v65
    %102 = vmatprep.subr.mxu0 0.0
    %103 = vmatpush1.msra.mxu0 %v64
    %104 = vmatprep.subr.mxu0 0.0
    %105 = vmatpush1.msra.mxu0 %v63
    %106 = vmatprep.subr.mxu0 0.0
    %107 = vmatpush2.msra.mxu0 0.0
    %108 = vmatprep.subr.mxu0 0.0
    %109 = vmatpush2.msra.mxu0 0.0
    %110 = vmatprep.subr.mxu0 0.0
    %111 = vmatpush2.msra.mxu0 0.0
    %112 = vmatprep.subr.mxu0 0.0
    %113 = vmatpush2.msra.mxu0 0.0
    %114 = vmatprep.subr.mxu0 0.0
    %115 = vmatpush2.msra.mxu0 0.0
    %116 = vmatprep.subr.mxu0 0.0
    %117 = vmatpush2.msra.mxu0 0.0
    %118 = vmatprep.subr.mxu0 0.0
    %119 = vmatpush2.msra.mxu0 0.0
    %120 = vmatprep.subr.mxu0 0.0
    %121 = vmatpush2.msra.mxu0 0.0
    %122 = vmatprep.subr.mxu0 0.0
    %123 = vmatpush2.msra.mxu0 0.0
    %124 = vmatprep.subr.mxu0 0.0
    %125 = vmatpush2.msra.mxu0 0.0
    %126 = vmatprep.subr.mxu0 0.0
    %127 = vmatpush2.msra.mxu0 0.0
    %128 = vmatprep.subr.mxu0 0.0
    %129 = vmatpush2.msra.mxu0 0.0
    %130 = vmatprep.subr.mxu0 0.0
    %131 = vmatpush2.msra.mxu0 0.0
    %132 = vmatprep.subr.mxu0 0.0
    %133 = vmatpush2.msra.mxu0 0.0
    %134 = vmatprep.subr.mxu0 0.0
    %135 = vmatpush2.msra.mxu0 0.0
    %136 = vmatprep.subr.mxu0 0.0
    %137 = vmatpush2.msra.mxu0 0.0
    %138 = vmatprep.mubr.f32.mxu0 0.0
    %139 = vmatmul.mubr.f32.gmra.mxu0 %v69
    %v140 = vpop.f32.mrf.mxu0
    %v141 = vadd.f32 0.0, %v140
    %v142 = vpop.f32.mrf.mxu0
    %143 = vmatprep.mubr.f32.mxu0 0.0
    %144 = vmatmul.mubr.f32.gmra.mxu0 %v72
    %v145 = vpop.f32.mrf.mxu0
    %v146 = vadd.f32 0.0, %v145
    %v147 = vpop.f32.mrf.mxu0
    %148 = vdwg.mxu0
    %151 = vrot.lane.b32.xlu0 %v141, 95
    %v152 = vpop.permute.xlu0 %151
    %153 = vrot.lane.b32.xlu0 %v146, 95
    %v154 = vpop.permute.xlu0 %153
    %vm155 = vcmask 7168
    %v157 = vsel %vm155, 1.0, 0
    %v159 = vsel %vm155, %v152, 0
    %v161 = vsel %vm155, %v154, 0
    %163 = vmatprep.subr.mxu0 0.0
    %164 = vmatpush1.xpose.msra.mxu0 0.0
    %165 = vmatprep.subr.mxu0 0.0
    %166 = vmatpush1.xpose.msra.mxu0 0.0
    %167 = vmatprep.subr.mxu0 0.0
    %168 = vmatpush1.xpose.msra.mxu0 0.0
    %169 = vmatprep.subr.mxu0 0.0
    %170 = vmatpush1.xpose.msra.mxu0 0.0
    %171 = vmatprep.subr.mxu0 0.0
    %172 = vmatpush1.xpose.msra.mxu0 0.0
    %173 = vmatprep.subr.mxu0 0.0
    %174 = vmatpush1.xpose.msra.mxu0 0.0
    %175 = vmatprep.subr.mxu0 0.0
    %176 = vmatpush1.xpose.msra.mxu0 0.0
    %177 = vmatprep.subr.mxu0 0.0
    %178 = vmatpush1.xpose.msra.mxu0 0.0
    %179 = vmatprep.subr.mxu0 0.0
    %180 = vmatpush1.xpose.msra.mxu0 0.0
    %181 = vmatprep.subr.mxu0 0.0
    %182 = vmatpush1.xpose.msra.mxu0 0.0
    %183 = vmatprep.subr.mxu0 0.0
    %184 = vmatpush1.xpose.msra.mxu0 0.0
    %185 = vmatprep.subr.mxu0 0.0
    %186 = vmatpush1.xpose.msra.mxu0 0.0
    %187 = vmatprep.subr.mxu0 0.0
    %188 = vmatpush1.xpose.msra.mxu0 0.0
    %189 = vmatprep.subr.mxu0 0.0
    %190 = vmatpush1.xpose.msra.mxu0 0.0
    %191 = vmatprep.subr.mxu0 0.0
    %192 = vmatpush1.xpose.msra.mxu0 %v161
    %193 = vmatprep.subr.mxu0 0.0
    %194 = vmatpush1.xpose.msra.mxu0 %v159
    %195 = vmatprep.subr.mxu0 0.0
    %196 = vmatpush2.xpose.msra.mxu0 0.0
    %197 = vmatprep.subr.mxu0 0.0
    %198 = vmatpush2.xpose.msra.mxu0 0.0
    %199 = vmatprep.subr.mxu0 0.0
    %200 = vmatpush2.xpose.msra.mxu0 0.0
    %201 = vmatprep.subr.mxu0 0.0
    %202 = vmatpush2.xpose.msra.mxu0 0.0
    %203 = vmatprep.subr.mxu0 0.0
    %204 = vmatpush2.xpose.msra.mxu0 0.0
    %205 = vmatprep.subr.mxu0 0.0
    %206 = vmatpush2.xpose.msra.mxu0 0.0
    %207 = vmatprep.subr.mxu0 0.0
    %208 = vmatpush2.xpose.msra.mxu0 0.0
    %209 = vmatprep.subr.mxu0 0.0
    %210 = vmatpush2.xpose.msra.mxu0 0.0
    %211 = vmatprep.subr.mxu0 0.0
    %212 = vmatpush2.xpose.msra.mxu0 0.0
    %213 = vmatprep.subr.mxu0 0.0
    %214 = vmatpush2.xpose.msra.mxu0 0.0
    %215 = vmatprep.subr.mxu0 0.0
    %216 = vmatpush2.xpose.msra.mxu0 0.0
    %217 = vmatprep.subr.mxu0 0.0
    %218 = vmatpush2.xpose.msra.mxu0 0.0
    %219 = vmatprep.subr.mxu0 0.0
    %220 = vmatpush2.xpose.msra.mxu0 0.0
    %221 = vmatprep.subr.mxu0 0.0
    %222 = vmatpush2.xpose.msra.mxu0 0.0
    %223 = vmatprep.subr.mxu0 0.0
    %224 = vmatpush2.xpose.msra.mxu0 0.0
    %225 = vmatprep.subr.mxu0 0.0
    %226 = vmatpush2.xpose.msra.mxu0 0.0
    %227 = vmatprep.mubr.f32.mxu0 0.0
    %228 = vmatmul.mubr.f32.gmra.mxu0 %v157
    %v229 = vpop.f32.mrf.mxu0
    %v230 = vadd.f32 0.0, %v229
    %v231 = vpop.f32.mrf.mxu0
    %232 = vmatprep.mubr.f32.mxu0 0.0
    %233 = vmatmul.mubr.f32.gmra.mxu0 %v157
    %v234 = vpop.f32.mrf.mxu0
    %v235 = vadd.f32 0.0, %v234
    %v236 = vpop.f32.mrf.mxu0
    %237 = vdwg.mxu0
    %238 = vset.pattern.permute.xlu0 32
    %239 = vperm.xlu0 %238, %v141
    %v240 = vpop.permute.xlu0 %239
    %242 = vset.pattern.permute.xlu0 32
    %243 = vperm.xlu0 %242, %v146
    %v244 = vpop.permute.xlu0 %243
    %v246 = vadd.f32 %v240, %v230
    %v247 = vadd.f32 %v244, %v235
    %vm248 = vcmp.gt.f32.partialorder %v246, 0.0
    %vm249 = vcmp.gt.f32.partialorder %v247, 0.0
    %v250 = vmul.f32 %v246, 0.2
    %v251 = vmul.f32 %v247, 0.2
    %v252 = vsel %vm248, %v246, %v250
    %v253 = vsel %vm249, %v247, %v251
    %v254 = vadd.f32 %v252, %v59
    %v255 = vadd.f32 %v253, %v60
    %vm256 = vcmask 130048
    %v257 = vsel %vm256, %v254, -inf
    %258 = vmax.xlane.f32.xlu0 %v257
    %v259 = vpop.xlane.xlu0 %258
    %v260 = vsel %vm256, %v255, -inf
    %261 = vmax.xlane.f32.xlu0 %v260
    %v262 = vpop.xlane.xlu0 %261
    %v263 = vsub.f32 %v254, %v259
    %v264 = vsub.f32 %v255, %v262
    %v265 = vmul.f32 %v263, 1.442695
    %v266 = vpow.pop %v265
    %v267 = vmul.f32 %v264, 1.442695
    %v268 = vpow.pop %v267
    %v269 = vsel %vm256, %v266, 0.0
    %270 = vadd.xlane.f32.xlu0 %v269
    %v271 = vpop.xlane.xlu0 %270
    %v272 = vsel %vm256, %v268, 0.0
    %273 = vadd.xlane.f32.xlu0 %v272
    %v274 = vpop.xlane.xlu0 %273
    %v275 = vrcp.pop %v271
    %v276 = vrcp.pop %v274
    %v277 = vmul.f32 %v266, %v275
    %v278 = vmul.f32 %v268, %v276
    %v280 = vsel %vm256, %v277, 0
    %v283 = vsel %vm256, %v278, 0
    %285 = vmatprep.subr.mxu0 0.0
    %286 = vmatpush1.msra.mxu0 0.0
    %287 = vmatprep.subr.mxu0 0.0
    %288 = vmatpush1.msra.mxu0 0.0
    %289 = vmatprep.subr.mxu0 0.0
    %290 = vmatpush1.msra.mxu0 0.0
    %291 = vmatprep.subr.mxu0 0.0
    %292 = vmatpush1.msra.mxu0 0.0
    %293 = vmatprep.subr.mxu0 0.0
    %294 = vmatpush1.msra.mxu0 0.0
    %295 = vmatprep.subr.mxu0 0.0
    %296 = vmatpush1.msra.mxu0 0.0
    %297 = vmatprep.subr.mxu0 0.0
    %298 = vmatpush1.msra.mxu0 0.0
    %299 = vmatprep.subr.mxu0 0.0
    %300 = vmatpush1.msra.mxu0 0.0
    %301 = vmatprep.subr.mxu0 0.0
    %302 = vmatpush1.msra.mxu0 0.0
    %303 = vmatprep.subr.mxu0 0.0
    %304 = vmatpush1.msra.mxu0 0.0
    %305 = vmatprep.subr.mxu0 0.0
    %306 = vmatpush1.msra.mxu0 0.0
    %307 = vmatprep.subr.mxu0 0.0
    %308 = vmatpush1.msra.mxu0 0.0
    %309 = vmatprep.subr.mxu0 0.0
    %310 = vmatpush1.msra.mxu0 0.0
    %311 = vmatprep.subr.mxu0 0.0
    %312 = vmatpush1.msra.mxu0 0.0
    %313 = vmatprep.subr.mxu0 0.0
    %314 = vmatpush1.msra.mxu0 %v146
    %315 = vmatprep.subr.mxu0 0.0
    %316 = vmatpush1.msra.mxu0 %v141
    %317 = vmatprep.subr.mxu0 0.0
    %318 = vmatpush2.msra.mxu0 0.0
    %319 = vmatprep.subr.mxu0 0.0
    %320 = vmatpush2.msra.mxu0 0.0
    %321 = vmatprep.subr.mxu0 0.0
    %322 = vmatpush2.msra.mxu0 0.0
    %323 = vmatprep.subr.mxu0 0.0
    %324 = vmatpush2.msra.mxu0 0.0
    %325 = vmatprep.subr.mxu0 0.0
    %326 = vmatpush2.msra.mxu0 0.0
    %327 = vmatprep.subr.mxu0 0.0
    %328 = vmatpush2.msra.mxu0 0.0
    %329 = vmatprep.subr.mxu0 0.0
    %330 = vmatpush2.msra.mxu0 0.0
    %331 = vmatprep.subr.mxu0 0.0
    %332 = vmatpush2.msra.mxu0 0.0
    %333 = vmatprep.subr.mxu0 0.0
    %334 = vmatpush2.msra.mxu0 0.0
    %335 = vmatprep.subr.mxu0 0.0
    %336 = vmatpush2.msra.mxu0 0.0
    %337 = vmatprep.subr.mxu0 0.0
    %338 = vmatpush2.msra.mxu0 0.0
    %339 = vmatprep.subr.mxu0 0.0
    %340 = vmatpush2.msra.mxu0 0.0
    %341 = vmatprep.subr.mxu0 0.0
    %342 = vmatpush2.msra.mxu0 0.0
    %343 = vmatprep.subr.mxu0 0.0
    %344 = vmatpush2.msra.mxu0 0.0
    %345 = vmatprep.subr.mxu0 0.0
    %346 = vmatpush2.msra.mxu0 0.0
    %347 = vmatprep.subr.mxu0 0.0
    %348 = vmatpush2.msra.mxu0 0.0
    %349 = vmatprep.mubr.f32.mxu0 0.0
    %350 = vmatmul.mubr.f32.gmra.mxu0 %v280
    %v351 = vpop.f32.mrf.mxu0
    %v352 = vadd.f32 0.0, %v351
    %v353 = vpop.f32.mrf.mxu0
    %354 = vmatprep.mubr.f32.mxu0 0.0
    %355 = vmatmul.mubr.f32.gmra.mxu0 %v283
    %v356 = vpop.f32.mrf.mxu0
    %v357 = vadd.f32 0.0, %v356
    %v358 = vpop.f32.mrf.mxu0
    %359 = vdwg.mxu0
    %v360 = vtanh.pop %v352
    %v361 = vtanh.pop %v357
    %s362 = scalar_lea.vmem [#allocation7], 32
    %v363 = vld [vmem:[%s362] sm:$0xff]
    %v364 = vld [vmem:[%s362 + $0x8] sm:$0xff]
    %v365 = vld [vmem:[%s362 + $0x10] sm:$0xff]
    %v366 = vld [vmem:[%s362 + $0x18] sm:$0xff]
    %v368 = vsel %vm67, %v360, 0
    %v371 = vsel %vm67, %v361, 0
    %373 = vmatprep.subr.mxu0 0.0
    %374 = vmatpush1.msra.mxu0 0.0
    %375 = vmatprep.subr.mxu0 0.0
    %376 = vmatpush1.msra.mxu0 0.0
    %377 = vmatprep.subr.mxu0 0.0
    %378 = vmatpush1.msra.mxu0 0.0
    %379 = vmatprep.subr.mxu0 0.0
    %380 = vmatpush1.msra.mxu0 0.0
    %381 = vmatprep.subr.mxu0 0.0
    %382 = vmatpush1.msra.mxu0 0.0
    %383 = vmatprep.subr.mxu0 0.0
    %384 = vmatpush1.msra.mxu0 0.0
    %385 = vmatprep.subr.mxu0 0.0
    %386 = vmatpush1.msra.mxu0 0.0
    %387 = vmatprep.subr.mxu0 0.0
    %388 = vmatpush1.msra.mxu0 0.0
    %389 = vmatprep.subr.mxu0 0.0
    %390 = vmatpush1.msra.mxu0 0.0
    %391 = vmatprep.subr.mxu0 0.0
    %392 = vmatpush1.msra.mxu0 0.0
    %393 = vmatprep.subr.mxu0 0.0
    %394 = vmatpush1.msra.mxu0 0.0
    %395 = vmatprep.subr.mxu0 0.0
    %396 = vmatpush1.msra.mxu0 0.0
    %397 = vmatprep.subr.mxu0 0.0
    %398 = vmatpush1.msra.mxu0 %v366
    %399 = vmatprep.subr.mxu0 0.0
    %400 = vmatpush1.msra.mxu0 %v365
    %401 = vmatprep.subr.mxu0 0.0
    %402 = vmatpush1.msra.mxu0 %v364
    %403 = vmatprep.subr.mxu0 0.0
    %404 = vmatpush1.msra.mxu0 %v363
    %405 = vmatprep.subr.mxu0 0.0
    %406 = vmatpush2.msra.mxu0 0.0
    %407 = vmatprep.subr.mxu0 0.0
    %408 = vmatpush2.msra.mxu0 0.0
    %409 = vmatprep.subr.mxu0 0.0
    %410 = vmatpush2.msra.mxu0 0.0
    %411 = vmatprep.subr.mxu0 0.0
    %412 = vmatpush2.msra.mxu0 0.0
    %413 = vmatprep.subr.mxu0 0.0
    %414 = vmatpush2.msra.mxu0 0.0
    %415 = vmatprep.subr.mxu0 0.0
    %416 = vmatpush2.msra.mxu0 0.0
    %417 = vmatprep.subr.mxu0 0.0
    %418 = vmatpush2.msra.mxu0 0.0
    %419 = vmatprep.subr.mxu0 0.0
    %420 = vmatpush2.msra.mxu0 0.0
    %421 = vmatprep.subr.mxu0 0.0
    %422 = vmatpush2.msra.mxu0 0.0
    %423 = vmatprep.subr.mxu0 0.0
    %424 = vmatpush2.msra.mxu0 0.0
    %425 = vmatprep.subr.mxu0 0.0
    %426 = vmatpush2.msra.mxu0 0.0
    %427 = vmatprep.subr.mxu0 0.0
    %428 = vmatpush2.msra.mxu0 0.0
    %429 = vmatprep.subr.mxu0 0.0
    %430 = vmatpush2.msra.mxu0 0.0
    %431 = vmatprep.subr.mxu0 0.0
    %432 = vmatpush2.msra.mxu0 0.0
    %433 = vmatprep.subr.mxu0 0.0
    %434 = vmatpush2.msra.mxu0 0.0
    %435 = vmatprep.subr.mxu0 0.0
    %436 = vmatpush2.msra.mxu0 0.0
    %437 = vmatprep.mubr.f32.mxu0 0.0
    %438 = vmatmul.mubr.f32.gmra.mxu0 %v368
    %v439 = vpop.f32.mrf.mxu0
    %v440 = vadd.f32 0.0, %v439
    %v441 = vpop.f32.mrf.mxu0
    %442 = vmatprep.mubr.f32.mxu0 0.0
    %443 = vmatmul.mubr.f32.gmra.mxu0 %v371
    %v444 = vpop.f32.mrf.mxu0
    %v445 = vadd.f32 0.0, %v444
    %v446 = vpop.f32.mrf.mxu0
    %447 = vdwg.mxu0
    %450 = vrot.lane.b32.xlu0 %v440, 95
    %v451 = vpop.permute.xlu0 %450
    %452 = vrot.lane.b32.xlu0 %v445, 95
    %v453 = vpop.permute.xlu0 %452
    %v454 = vsel %vm155, %v451, 0
    %v456 = vsel %vm155, %v453, 0
    %458 = vmatprep.subr.mxu0 0.0
    %459 = vmatpush1.xpose.msra.mxu0 0.0
    %460 = vmatprep.subr.mxu0 0.0
    %461 = vmatpush1.xpose.msra.mxu0 0.0
    %462 = vmatprep.subr.mxu0 0.0
    %463 = vmatpush1.xpose.msra.mxu0 0.0
    %464 = vmatprep.subr.mxu0 0.0
    %465 = vmatpush1.xpose.msra.mxu0 0.0
    %466 = vmatprep.subr.mxu0 0.0
    %467 = vmatpush1.xpose.msra.mxu0 0.0
    %468 = vmatprep.subr.mxu0 0.0
    %469 = vmatpush1.xpose.msra.mxu0 0.0
    %470 = vmatprep.subr.mxu0 0.0
    %471 = vmatpush1.xpose.msra.mxu0 0.0
    %472 = vmatprep.subr.mxu0 0.0
    %473 = vmatpush1.xpose.msra.mxu0 0.0
    %474 = vmatprep.subr.mxu0 0.0
    %475 = vmatpush1.xpose.msra.mxu0 0.0
    %476 = vmatprep.subr.mxu0 0.0
    %477 = vmatpush1.xpose.msra.mxu0 0.0
    %478 = vmatprep.subr.mxu0 0.0
    %479 = vmatpush1.xpose.msra.mxu0 0.0
    %480 = vmatprep.subr.mxu0 0.0
    %481 = vmatpush1.xpose.msra.mxu0 0.0
    %482 = vmatprep.subr.mxu0 0.0
    %483 = vmatpush1.xpose.msra.mxu0 0.0
    %484 = vmatprep.subr.mxu0 0.0
    %485 = vmatpush1.xpose.msra.mxu0 0.0
    %486 = vmatprep.subr.mxu0 0.0
    %487 = vmatpush1.xpose.msra.mxu0 %v456
    %488 = vmatprep.subr.mxu0 0.0
    %489 = vmatpush1.xpose.msra.mxu0 %v454
    %490 = vmatprep.subr.mxu0 0.0
    %491 = vmatpush2.xpose.msra.mxu0 0.0
    %492 = vmatprep.subr.mxu0 0.0
    %493 = vmatpush2.xpose.msra.mxu0 0.0
    %494 = vmatprep.subr.mxu0 0.0
    %495 = vmatpush2.xpose.msra.mxu0 0.0
    %496 = vmatprep.subr.mxu0 0.0
    %497 = vmatpush2.xpose.msra.mxu0 0.0
    %498 = vmatprep.subr.mxu0 0.0
    %499 = vmatpush2.xpose.msra.mxu0 0.0
    %500 = vmatprep.subr.mxu0 0.0
    %501 = vmatpush2.xpose.msra.mxu0 0.0
    %502 = vmatprep.subr.mxu0 0.0
    %503 = vmatpush2.xpose.msra.mxu0 0.0
    %504 = vmatprep.subr.mxu0 0.0
    %505 = vmatpush2.xpose.msra.mxu0 0.0
    %506 = vmatprep.subr.mxu0 0.0
    %507 = vmatpush2.xpose.msra.mxu0 0.0
    %508 = vmatprep.subr.mxu0 0.0
    %509 = vmatpush2.xpose.msra.mxu0 0.0
    %510 = vmatprep.subr.mxu0 0.0
    %511 = vmatpush2.xpose.msra.mxu0 0.0
    %512 = vmatprep.subr.mxu0 0.0
    %513 = vmatpush2.xpose.msra.mxu0 0.0
    %514 = vmatprep.subr.mxu0 0.0
    %515 = vmatpush2.xpose.msra.mxu0 0.0
    %516 = vmatprep.subr.mxu0 0.0
    %517 = vmatpush2.xpose.msra.mxu0 0.0
    %518 = vmatprep.subr.mxu0 0.0
    %519 = vmatpush2.xpose.msra.mxu0 0.0
    %520 = vmatprep.subr.mxu0 0.0
    %521 = vmatpush2.xpose.msra.mxu0 0.0
    %522 = vmatprep.mubr.f32.mxu0 0.0
    %523 = vmatmul.mubr.f32.gmra.mxu0 %v157
    %v524 = vpop.f32.mrf.mxu0
    %v525 = vadd.f32 0.0, %v524
    %v526 = vpop.f32.mrf.mxu0
    %527 = vmatprep.mubr.f32.mxu0 0.0
    %528 = vmatmul.mubr.f32.gmra.mxu0 %v157
    %v529 = vpop.f32.mrf.mxu0
    %v530 = vadd.f32 0.0, %v529
    %v531 = vpop.f32.mrf.mxu0
    %532 = vdwg.mxu0
    %533 = vset.pattern.permute.xlu0 32
    %534 = vperm.xlu0 %533, %v440
    %v535 = vpop.permute.xlu0 %534
    %537 = vset.pattern.permute.xlu0 32
    %538 = vperm.xlu0 %537, %v445
    %v539 = vpop.permute.xlu0 %538
    %v541 = vadd.f32 %v535, %v525
    %v542 = vadd.f32 %v539, %v530
    %vm543 = vcmp.gt.f32.partialorder %v541, 0.0
    %vm544 = vcmp.gt.f32.partialorder %v542, 0.0
    %v545 = vmul.f32 %v541, 0.2
    %v546 = vmul.f32 %v542, 0.2
    %v547 = vsel %vm543, %v541, %v545
    %v548 = vsel %vm544, %v542, %v546
    %v549 = vadd.f32 %v547, %v59
    %v550 = vadd.f32 %v548, %v60
    %v551 = vsel %vm256, %v549, -inf
    %552 = vmax.xlane.f32.xlu0 %v551
    %v553 = vpop.xlane.xlu0 %552
    %v554 = vsel %vm256, %v550, -inf
    %555 = vmax.xlane.f32.xlu0 %v554
    %v556 = vpop.xlane.xlu0 %555
    %v557 = vsub.f32 %v549, %v553
    %v558 = vsub.f32 %v550, %v556
    %v559 = vmul.f32 %v557, 1.442695
    %v560 = vpow.pop %v559
    %v561 = vmul.f32 %v558, 1.442695
    %v562 = vpow.pop %v561
    %v563 = vsel %vm256, %v560, 0.0
    %564 = vadd.xlane.f32.xlu0 %v563
    %v565 = vpop.xlane.xlu0 %564
    %v566 = vsel %vm256, %v562, 0.0
    %567 = vadd.xlane.f32.xlu0 %v566
    %v568 = vpop.xlane.xlu0 %567
    %v569 = vrcp.pop %v565
    %v570 = vrcp.pop %v568
    %v571 = vmul.f32 %v560, %v569
    %v572 = vmul.f32 %v562, %v570
    %v574 = vsel %vm256, %v571, 0
    %v577 = vsel %vm256, %v572, 0
    %579 = vmatprep.subr.mxu0 0.0
    %580 = vmatpush1.msra.mxu0 0.0
    %581 = vmatprep.subr.mxu0 0.0
    %582 = vmatpush1.msra.mxu0 0.0
    %583 = vmatprep.subr.mxu0 0.0
    %584 = vmatpush1.msra.mxu0 0.0
    %585 = vmatprep.subr.mxu0 0.0
    %586 = vmatpush1.msra.mxu0 0.0
    %587 = vmatprep.subr.mxu0 0.0
    %588 = vmatpush1.msra.mxu0 0.0
    %589 = vmatprep.subr.mxu0 0.0
    %590 = vmatpush1.msra.mxu0 0.0
    %591 = vmatprep.subr.mxu0 0.0
    %592 = vmatpush1.msra.mxu0 0.0
    %593 = vmatprep.subr.mxu0 0.0
    %594 = vmatpush1.msra.mxu0 0.0
    %595 = vmatprep.subr.mxu0 0.0
    %596 = vmatpush1.msra.mxu0 0.0
    %597 = vmatprep.subr.mxu0 0.0
    %598 = vmatpush1.msra.mxu0 0.0
    %599 = vmatprep.subr.mxu0 0.0
    %600 = vmatpush1.msra.mxu0 0.0
    %601 = vmatprep.subr.mxu0 0.0
    %602 = vmatpush1.msra.mxu0 0.0
    %603 = vmatprep.subr.mxu0 0.0
    %604 = vmatpush1.msra.mxu0 0.0
    %605 = vmatprep.subr.mxu0 0.0
    %606 = vmatpush1.msra.mxu0 0.0
    %607 = vmatprep.subr.mxu0 0.0
    %608 = vmatpush1.msra.mxu0 %v445
    %609 = vmatprep.subr.mxu0 0.0
    %610 = vmatpush1.msra.mxu0 %v440
    %611 = vmatprep.subr.mxu0 0.0
    %612 = vmatpush2.msra.mxu0 0.0
    %613 = vmatprep.subr.mxu0 0.0
    %614 = vmatpush2.msra.mxu0 0.0
    %615 = vmatprep.subr.mxu0 0.0
    %616 = vmatpush2.msra.mxu0 0.0
    %617 = vmatprep.subr.mxu0 0.0
    %618 = vmatpush2.msra.mxu0 0.0
    %619 = vmatprep.subr.mxu0 0.0
    %620 = vmatpush2.msra.mxu0 0.0
    %621 = vmatprep.subr.mxu0 0.0
    %622 = vmatpush2.msra.mxu0 0.0
    %623 = vmatprep.subr.mxu0 0.0
    %624 = vmatpush2.msra.mxu0 0.0
    %625 = vmatprep.subr.mxu0 0.0
    %626 = vmatpush2.msra.mxu0 0.0
    %627 = vmatprep.subr.mxu0 0.0
    %628 = vmatpush2.msra.mxu0 0.0
    %629 = vmatprep.subr.mxu0 0.0
    %630 = vmatpush2.msra.mxu0 0.0
    %631 = vmatprep.subr.mxu0 0.0
    %632 = vmatpush2.msra.mxu0 0.0
    %633 = vmatprep.subr.mxu0 0.0
    %634 = vmatpush2.msra.mxu0 0.0
    %635 = vmatprep.subr.mxu0 0.0
    %636 = vmatpush2.msra.mxu0 0.0
    %637 = vmatprep.subr.mxu0 0.0
    %638 = vmatpush2.msra.mxu0 0.0
    %639 = vmatprep.subr.mxu0 0.0
    %640 = vmatpush2.msra.mxu0 0.0
    %641 = vmatprep.subr.mxu0 0.0
    %642 = vmatpush2.msra.mxu0 0.0
    %643 = vmatprep.mubr.f32.mxu0 0.0
    %644 = vmatmul.mubr.f32.gmra.mxu0 %v574
    %v645 = vpop.f32.mrf.mxu0
    %v646 = vadd.f32 %v360, %v645
    %v647 = vpop.f32.mrf.mxu0
    %648 = vmatprep.mubr.f32.mxu0 0.0
    %649 = vmatmul.mubr.f32.gmra.mxu0 %v577
    %v650 = vpop.f32.mrf.mxu0
    %v651 = vadd.f32 %v361, %v650
    %v652 = vpop.f32.mrf.mxu0
    %653 = vdwg.mxu0
    %v654 = vtanh.pop %v646
    %v655 = vtanh.pop %v651
    %s656 = scalar_lea.vmem [#allocation7], 64
    %v657 = vld [vmem:[%s656] sm:$0xff]
    %v658 = vld [vmem:[%s656 + $0x8] sm:$0xff]
    %v659 = vld [vmem:[%s656 + $0x10] sm:$0xff]
    %v660 = vld [vmem:[%s656 + $0x18] sm:$0xff]
    %v662 = vsel %vm67, %v654, 0
    %v665 = vsel %vm67, %v655, 0
    %667 = vmatprep.subr.mxu0 0.0
    %668 = vmatpush1.msra.mxu0 0.0
    %669 = vmatprep.subr.mxu0 0.0
    %670 = vmatpush1.msra.mxu0 0.0
    %671 = vmatprep.subr.mxu0 0.0
    %672 = vmatpush1.msra.mxu0 0.0
    %673 = vmatprep.subr.mxu0 0.0
    %674 = vmatpush1.msra.mxu0 0.0
    %675 = vmatprep.subr.mxu0 0.0
    %676 = vmatpush1.msra.mxu0 0.0
    %677 = vmatprep.subr.mxu0 0.0
    %678 = vmatpush1.msra.mxu0 0.0
    %679 = vmatprep.subr.mxu0 0.0
    %680 = vmatpush1.msra.mxu0 0.0
    %681 = vmatprep.subr.mxu0 0.0
    %682 = vmatpush1.msra.mxu0 0.0
    %683 = vmatprep.subr.mxu0 0.0
    %684 = vmatpush1.msra.mxu0 0.0
    %685 = vmatprep.subr.mxu0 0.0
    %686 = vmatpush1.msra.mxu0 0.0
    %687 = vmatprep.subr.mxu0 0.0
    %688 = vmatpush1.msra.mxu0 0.0
    %689 = vmatprep.subr.mxu0 0.0
    %690 = vmatpush1.msra.mxu0 0.0
    %691 = vmatprep.subr.mxu0 0.0
    %692 = vmatpush1.msra.mxu0 %v660
    %693 = vmatprep.subr.mxu0 0.0
    %694 = vmatpush1.msra.mxu0 %v659
    %695 = vmatprep.subr.mxu0 0.0
    %696 = vmatpush1.msra.mxu0 %v658
    %697 = vmatprep.subr.mxu0 0.0
    %698 = vmatpush1.msra.mxu0 %v657
    %699 = vmatprep.subr.mxu0 0.0
    %700 = vmatpush2.msra.mxu0 0.0
    %701 = vmatprep.subr.mxu0 0.0
    %702 = vmatpush2.msra.mxu0 0.0
    %703 = vmatprep.subr.mxu0 0.0
    %704 = vmatpush2.msra.mxu0 0.0
    %705 = vmatprep.subr.mxu0 0.0
    %706 = vmatpush2.msra.mxu0 0.0
    %707 = vmatprep.subr.mxu0 0.0
    %708 = vmatpush2.msra.mxu0 0.0
    %709 = vmatprep.subr.mxu0 0.0
    %710 = vmatpush2.msra.mxu0 0.0
    %711 = vmatprep.subr.mxu0 0.0
    %712 = vmatpush2.msra.mxu0 0.0
    %713 = vmatprep.subr.mxu0 0.0
    %714 = vmatpush2.msra.mxu0 0.0
    %715 = vmatprep.subr.mxu0 0.0
    %716 = vmatpush2.msra.mxu0 0.0
    %717 = vmatprep.subr.mxu0 0.0
    %718 = vmatpush2.msra.mxu0 0.0
    %719 = vmatprep.subr.mxu0 0.0
    %720 = vmatpush2.msra.mxu0 0.0
    %721 = vmatprep.subr.mxu0 0.0
    %722 = vmatpush2.msra.mxu0 0.0
    %723 = vmatprep.subr.mxu0 0.0
    %724 = vmatpush2.msra.mxu0 0.0
    %725 = vmatprep.subr.mxu0 0.0
    %726 = vmatpush2.msra.mxu0 0.0
    %727 = vmatprep.subr.mxu0 0.0
    %728 = vmatpush2.msra.mxu0 0.0
    %729 = vmatprep.subr.mxu0 0.0
    %730 = vmatpush2.msra.mxu0 0.0
    %731 = vmatprep.mubr.f32.mxu0 0.0
    %732 = vmatmul.mubr.f32.gmra.mxu0 %v662
    %v733 = vpop.f32.mrf.mxu0
    %v734 = vadd.f32 0.0, %v733
    %v735 = vpop.f32.mrf.mxu0
    %736 = vmatprep.mubr.f32.mxu0 0.0
    %737 = vmatmul.mubr.f32.gmra.mxu0 %v665
    %v738 = vpop.f32.mrf.mxu0
    %v739 = vadd.f32 0.0, %v738
    %v740 = vpop.f32.mrf.mxu0
    %741 = vdwg.mxu0
    %744 = vrot.lane.b32.xlu0 %v734, 95
    %v745 = vpop.permute.xlu0 %744
    %746 = vrot.lane.b32.xlu0 %v739, 95
    %v747 = vpop.permute.xlu0 %746
    %v748 = vsel %vm155, %v745, 0
    %v750 = vsel %vm155, %v747, 0
    %752 = vmatprep.subr.mxu0 0.0
    %753 = vmatpush1.xpose.msra.mxu0 0.0
    %754 = vmatprep.subr.mxu0 0.0
    %755 = vmatpush1.xpose.msra.mxu0 0.0
    %756 = vmatprep.subr.mxu0 0.0
    %757 = vmatpush1.xpose.msra.mxu0 0.0
    %758 = vmatprep.subr.mxu0 0.0
    %759 = vmatpush1.xpose.msra.mxu0 0.0
    %760 = vmatprep.subr.mxu0 0.0
    %761 = vmatpush1.xpose.msra.mxu0 0.0
    %762 = vmatprep.subr.mxu0 0.0
    %763 = vmatpush1.xpose.msra.mxu0 0.0
    %764 = vmatprep.subr.mxu0 0.0
    %765 = vmatpush1.xpose.msra.mxu0 0.0
    %766 = vmatprep.subr.mxu0 0.0
    %767 = vmatpush1.xpose.msra.mxu0 0.0
    %768 = vmatprep.subr.mxu0 0.0
    %769 = vmatpush1.xpose.msra.mxu0 0.0
    %770 = vmatprep.subr.mxu0 0.0
    %771 = vmatpush1.xpose.msra.mxu0 0.0
    %772 = vmatprep.subr.mxu0 0.0
    %773 = vmatpush1.xpose.msra.mxu0 0.0
    %774 = vmatprep.subr.mxu0 0.0
    %775 = vmatpush1.xpose.msra.mxu0 0.0
    %776 = vmatprep.subr.mxu0 0.0
    %777 = vmatpush1.xpose.msra.mxu0 0.0
    %778 = vmatprep.subr.mxu0 0.0
    %779 = vmatpush1.xpose.msra.mxu0 0.0
    %780 = vmatprep.subr.mxu0 0.0
    %781 = vmatpush1.xpose.msra.mxu0 %v750
    %782 = vmatprep.subr.mxu0 0.0
    %783 = vmatpush1.xpose.msra.mxu0 %v748
    %784 = vmatprep.subr.mxu0 0.0
    %785 = vmatpush2.xpose.msra.mxu0 0.0
    %786 = vmatprep.subr.mxu0 0.0
    %787 = vmatpush2.xpose.msra.mxu0 0.0
    %788 = vmatprep.subr.mxu0 0.0
    %789 = vmatpush2.xpose.msra.mxu0 0.0
    %790 = vmatprep.subr.mxu0 0.0
    %791 = vmatpush2.xpose.msra.mxu0 0.0
    %792 = vmatprep.subr.mxu0 0.0
    %793 = vmatpush2.xpose.msra.mxu0 0.0
    %794 = vmatprep.subr.mxu0 0.0
    %795 = vmatpush2.xpose.msra.mxu0 0.0
    %796 = vmatprep.subr.mxu0 0.0
    %797 = vmatpush2.xpose.msra.mxu0 0.0
    %798 = vmatprep.subr.mxu0 0.0
    %799 = vmatpush2.xpose.msra.mxu0 0.0
    %800 = vmatprep.subr.mxu0 0.0
    %801 = vmatpush2.xpose.msra.mxu0 0.0
    %802 = vmatprep.subr.mxu0 0.0
    %803 = vmatpush2.xpose.msra.mxu0 0.0
    %804 = vmatprep.subr.mxu0 0.0
    %805 = vmatpush2.xpose.msra.mxu0 0.0
    %806 = vmatprep.subr.mxu0 0.0
    %807 = vmatpush2.xpose.msra.mxu0 0.0
    %808 = vmatprep.subr.mxu0 0.0
    %809 = vmatpush2.xpose.msra.mxu0 0.0
    %810 = vmatprep.subr.mxu0 0.0
    %811 = vmatpush2.xpose.msra.mxu0 0.0
    %812 = vmatprep.subr.mxu0 0.0
    %813 = vmatpush2.xpose.msra.mxu0 0.0
    %814 = vmatprep.subr.mxu0 0.0
    %815 = vmatpush2.xpose.msra.mxu0 0.0
    %816 = vmatprep.mubr.f32.mxu0 0.0
    %817 = vmatmul.mubr.f32.gmra.mxu0 %v157
    %v818 = vpop.f32.mrf.mxu0
    %v819 = vadd.f32 0.0, %v818
    %v820 = vpop.f32.mrf.mxu0
    %821 = vmatprep.mubr.f32.mxu0 0.0
    %822 = vmatmul.mubr.f32.gmra.mxu0 %v157
    %v823 = vpop.f32.mrf.mxu0
    %v824 = vadd.f32 0.0, %v823
    %v825 = vpop.f32.mrf.mxu0
    %826 = vdwg.mxu0
    %827 = vset.pattern.permute.xlu0 32
    %828 = vperm.xlu0 %827, %v734
    %v829 = vpop.permute.xlu0 %828
    %831 = vset.pattern.permute.xlu0 32
    %832 = vperm.xlu0 %831, %v739
    %v833 = vpop.permute.xlu0 %832
    %v835 = vadd.f32 %v829, %v819
    %v836 = vadd.f32 %v833, %v824
    %vm837 = vcmp.gt.f32.partialorder %v835, 0.0
    %vm838 = vcmp.gt.f32.partialorder %v836, 0.0
    %v839 = vmul.f32 %v835, 0.2
    %v840 = vmul.f32 %v836, 0.2
    %v841 = vsel %vm837, %v835, %v839
    %v842 = vsel %vm838, %v836, %v840
    %v843 = vadd.f32 %v841, %v59
    %v844 = vadd.f32 %v842, %v60
    %v845 = vsel %vm256, %v843, -inf
    %846 = vmax.xlane.f32.xlu0 %v845
    %v847 = vpop.xlane.xlu0 %846
    %v848 = vsel %vm256, %v844, -inf
    %849 = vmax.xlane.f32.xlu0 %v848
    %v850 = vpop.xlane.xlu0 %849
    %v851 = vsub.f32 %v843, %v847
    %v852 = vsub.f32 %v844, %v850
    %v853 = vmul.f32 %v851, 1.442695
    %v854 = vpow.pop %v853
    %v855 = vmul.f32 %v852, 1.442695
    %v856 = vpow.pop %v855
    %v857 = vsel %vm256, %v854, 0.0
    %858 = vadd.xlane.f32.xlu0 %v857
    %v859 = vpop.xlane.xlu0 %858
    %v860 = vsel %vm256, %v856, 0.0
    %861 = vadd.xlane.f32.xlu0 %v860
    %v862 = vpop.xlane.xlu0 %861
    %v863 = vrcp.pop %v859
    %v864 = vrcp.pop %v862
    %v865 = vmul.f32 %v854, %v863
    %v866 = vmul.f32 %v856, %v864
    %v868 = vsel %vm256, %v865, 0
    %v871 = vsel %vm256, %v866, 0
    %873 = vmatprep.subr.mxu0 0.0
    %874 = vmatpush1.msra.mxu0 0.0
    %875 = vmatprep.subr.mxu0 0.0
    %876 = vmatpush1.msra.mxu0 0.0
    %877 = vmatprep.subr.mxu0 0.0
    %878 = vmatpush1.msra.mxu0 0.0
    %879 = vmatprep.subr.mxu0 0.0
    %880 = vmatpush1.msra.mxu0 0.0
    %881 = vmatprep.subr.mxu0 0.0
    %882 = vmatpush1.msra.mxu0 0.0
    %883 = vmatprep.subr.mxu0 0.0
    %884 = vmatpush1.msra.mxu0 0.0
    %885 = vmatprep.subr.mxu0 0.0
    %886 = vmatpush1.msra.mxu0 0.0
    %887 = vmatprep.subr.mxu0 0.0
    %888 = vmatpush1.msra.mxu0 0.0
    %889 = vmatprep.subr.mxu0 0.0
    %890 = vmatpush1.msra.mxu0 0.0
    %891 = vmatprep.subr.mxu0 0.0
    %892 = vmatpush1.msra.mxu0 0.0
    %893 = vmatprep.subr.mxu0 0.0
    %894 = vmatpush1.msra.mxu0 0.0
    %895 = vmatprep.subr.mxu0 0.0
    %896 = vmatpush1.msra.mxu0 0.0
    %897 = vmatprep.subr.mxu0 0.0
    %898 = vmatpush1.msra.mxu0 0.0
    %899 = vmatprep.subr.mxu0 0.0
    %900 = vmatpush1.msra.mxu0 0.0
    %901 = vmatprep.subr.mxu0 0.0
    %902 = vmatpush1.msra.mxu0 %v739
    %903 = vmatprep.subr.mxu0 0.0
    %904 = vmatpush1.msra.mxu0 %v734
    %905 = vmatprep.subr.mxu0 0.0
    %906 = vmatpush2.msra.mxu0 0.0
    %907 = vmatprep.subr.mxu0 0.0
    %908 = vmatpush2.msra.mxu0 0.0
    %909 = vmatprep.subr.mxu0 0.0
    %910 = vmatpush2.msra.mxu0 0.0
    %911 = vmatprep.subr.mxu0 0.0
    %912 = vmatpush2.msra.mxu0 0.0
    %913 = vmatprep.subr.mxu0 0.0
    %914 = vmatpush2.msra.mxu0 0.0
    %915 = vmatprep.subr.mxu0 0.0
    %916 = vmatpush2.msra.mxu0 0.0
    %917 = vmatprep.subr.mxu0 0.0
    %918 = vmatpush2.msra.mxu0 0.0
    %919 = vmatprep.subr.mxu0 0.0
    %920 = vmatpush2.msra.mxu0 0.0
    %921 = vmatprep.subr.mxu0 0.0
    %922 = vmatpush2.msra.mxu0 0.0
    %923 = vmatprep.subr.mxu0 0.0
    %924 = vmatpush2.msra.mxu0 0.0
    %925 = vmatprep.subr.mxu0 0.0
    %926 = vmatpush2.msra.mxu0 0.0
    %927 = vmatprep.subr.mxu0 0.0
    %928 = vmatpush2.msra.mxu0 0.0
    %929 = vmatprep.subr.mxu0 0.0
    %930 = vmatpush2.msra.mxu0 0.0
    %931 = vmatprep.subr.mxu0 0.0
    %932 = vmatpush2.msra.mxu0 0.0
    %933 = vmatprep.subr.mxu0 0.0
    %934 = vmatpush2.msra.mxu0 0.0
    %935 = vmatprep.subr.mxu0 0.0
    %936 = vmatpush2.msra.mxu0 0.0
    %937 = vmatprep.mubr.f32.mxu0 0.0
    %938 = vmatmul.mubr.f32.gmra.mxu0 %v868
    %v939 = vpop.f32.mrf.mxu0
    %v940 = vadd.f32 %v654, %v939
    %v941 = vpop.f32.mrf.mxu0
    %942 = vmatprep.mubr.f32.mxu0 0.0
    %943 = vmatmul.mubr.f32.gmra.mxu0 %v871
    %v944 = vpop.f32.mrf.mxu0
    %v945 = vadd.f32 %v655, %v944
    %v946 = vpop.f32.mrf.mxu0
    %947 = vdwg.mxu0
    %v948 = vtanh.pop %v940
    %v949 = vtanh.pop %v945
    %s950 = scalar_lea.vmem [#allocation7], 96
    %v951 = vld [vmem:[%s950] sm:$0xff]
    %v952 = vld [vmem:[%s950 + $0x8] sm:$0xff]
    %v953 = vld [vmem:[%s950 + $0x10] sm:$0xff]
    %v954 = vld [vmem:[%s950 + $0x18] sm:$0xff]
    %v956 = vsel %vm67, %v948, 0
    %v959 = vsel %vm67, %v949, 0
    %961 = vmatprep.subr.mxu0 0.0
    %962 = vmatpush1.msra.mxu0 0.0
    %963 = vmatprep.subr.mxu0 0.0
    %964 = vmatpush1.msra.mxu0 0.0
    %965 = vmatprep.subr.mxu0 0.0
    %966 = vmatpush1.msra.mxu0 0.0
    %967 = vmatprep.subr.mxu0 0.0
    %968 = vmatpush1.msra.mxu0 0.0
    %969 = vmatprep.subr.mxu0 0.0
    %970 = vmatpush1.msra.mxu0 0.0
    %971 = vmatprep.subr.mxu0 0.0
    %972 = vmatpush1.msra.mxu0 0.0
    %973 = vmatprep.subr.mxu0 0.0
    %974 = vmatpush1.msra.mxu0 0.0
    %975 = vmatprep.subr.mxu0 0.0
    %976 = vmatpush1.msra.mxu0 0.0
    %977 = vmatprep.subr.mxu0 0.0
    %978 = vmatpush1.msra.mxu0 0.0
    %979 = vmatprep.subr.mxu0 0.0
    %980 = vmatpush1.msra.mxu0 0.0
    %981 = vmatprep.subr.mxu0 0.0
    %982 = vmatpush1.msra.mxu0 0.0
    %983 = vmatprep.subr.mxu0 0.0
    %984 = vmatpush1.msra.mxu0 0.0
    %985 = vmatprep.subr.mxu0 0.0
    %986 = vmatpush1.msra.mxu0 %v954
    %987 = vmatprep.subr.mxu0 0.0
    %988 = vmatpush1.msra.mxu0 %v953
    %989 = vmatprep.subr.mxu0 0.0
    %990 = vmatpush1.msra.mxu0 %v952
    %991 = vmatprep.subr.mxu0 0.0
    %992 = vmatpush1.msra.mxu0 %v951
    %993 = vmatprep.subr.mxu0 0.0
    %994 = vmatpush2.msra.mxu0 0.0
    %995 = vmatprep.subr.mxu0 0.0
    %996 = vmatpush2.msra.mxu0 0.0
    %997 = vmatprep.subr.mxu0 0.0
    %998 = vmatpush2.msra.mxu0 0.0
    %999 = vmatprep.subr.mxu0 0.0
    %1000 = vmatpush2.msra.mxu0 0.0
    %1001 = vmatprep.subr.mxu0 0.0
    %1002 = vmatpush2.msra.mxu0 0.0
    %1003 = vmatprep.subr.mxu0 0.0
    %1004 = vmatpush2.msra.mxu0 0.0
    %1005 = vmatprep.subr.mxu0 0.0
    %1006 = vmatpush2.msra.mxu0 0.0
    %1007 = vmatprep.subr.mxu0 0.0
    %1008 = vmatpush2.msra.mxu0 0.0
    %1009 = vmatprep.subr.mxu0 0.0
    %1010 = vmatpush2.msra.mxu0 0.0
    %1011 = vmatprep.subr.mxu0 0.0
    %1012 = vmatpush2.msra.mxu0 0.0
    %1013 = vmatprep.subr.mxu0 0.0
    %1014 = vmatpush2.msra.mxu0 0.0
    %1015 = vmatprep.subr.mxu0 0.0
    %1016 = vmatpush2.msra.mxu0 0.0
    %1017 = vmatprep.subr.mxu0 0.0
    %1018 = vmatpush2.msra.mxu0 0.0
    %1019 = vmatprep.subr.mxu0 0.0
    %1020 = vmatpush2.msra.mxu0 0.0
    %1021 = vmatprep.subr.mxu0 0.0
    %1022 = vmatpush2.msra.mxu0 0.0
    %1023 = vmatprep.subr.mxu0 0.0
    %1024 = vmatpush2.msra.mxu0 0.0
    %1025 = vmatprep.mubr.f32.mxu0 0.0
    %1026 = vmatmul.mubr.f32.gmra.mxu0 %v956
    %v1027 = vpop.f32.mrf.mxu0
    %v1028 = vadd.f32 0.0, %v1027
    %v1029 = vpop.f32.mrf.mxu0
    %1030 = vmatprep.mubr.f32.mxu0 0.0
    %1031 = vmatmul.mubr.f32.gmra.mxu0 %v959
    %v1032 = vpop.f32.mrf.mxu0
    %v1033 = vadd.f32 0.0, %v1032
    %v1034 = vpop.f32.mrf.mxu0
    %1035 = vdwg.mxu0
    %1038 = vrot.lane.b32.xlu0 %v1028, 95
    %v1039 = vpop.permute.xlu0 %1038
    %1040 = vrot.lane.b32.xlu0 %v1033, 95
    %v1041 = vpop.permute.xlu0 %1040
    %v1042 = vsel %vm155, %v1039, 0
    %v1044 = vsel %vm155, %v1041, 0
    %1046 = vmatprep.subr.mxu0 0.0
    %1047 = vmatpush1.xpose.msra.mxu0 0.0
    %1048 = vmatprep.subr.mxu0 0.0
    %1049 = vmatpush1.xpose.msra.mxu0 0.0
    %1050 = vmatprep.subr.mxu0 0.0
    %1051 = vmatpush1.xpose.msra.mxu0 0.0
    %1052 = vmatprep.subr.mxu0 0.0
    %1053 = vmatpush1.xpose.msra.mxu0 0.0
    %1054 = vmatprep.subr.mxu0 0.0
    %1055 = vmatpush1.xpose.msra.mxu0 0.0
    %1056 = vmatprep.subr.mxu0 0.0
    %1057 = vmatpush1.xpose.msra.mxu0 0.0
    %1058 = vmatprep.subr.mxu0 0.0
    %1059 = vmatpush1.xpose.msra.mxu0 0.0
    %1060 = vmatprep.subr.mxu0 0.0
    %1061 = vmatpush1.xpose.msra.mxu0 0.0
    %1062 = vmatprep.subr.mxu0 0.0
    %1063 = vmatpush1.xpose.msra.mxu0 0.0
    %1064 = vmatprep.subr.mxu0 0.0
    %1065 = vmatpush1.xpose.msra.mxu0 0.0
    %1066 = vmatprep.subr.mxu0 0.0
    %1067 = vmatpush1.xpose.msra.mxu0 0.0
    %1068 = vmatprep.subr.mxu0 0.0
    %1069 = vmatpush1.xpose.msra.mxu0 0.0
    %1070 = vmatprep.subr.mxu0 0.0
    %1071 = vmatpush1.xpose.msra.mxu0 0.0
    %1072 = vmatprep.subr.mxu0 0.0
    %1073 = vmatpush1.xpose.msra.mxu0 0.0
    %1074 = vmatprep.subr.mxu0 0.0
    %1075 = vmatpush1.xpose.msra.mxu0 %v1044
    %1076 = vmatprep.subr.mxu0 0.0
    %1077 = vmatpush1.xpose.msra.mxu0 %v1042
    %1078 = vmatprep.subr.mxu0 0.0
    %1079 = vmatpush2.xpose.msra.mxu0 0.0
    %1080 = vmatprep.subr.mxu0 0.0
    %1081 = vmatpush2.xpose.msra.mxu0 0.0
    %1082 = vmatprep.subr.mxu0 0.0
    %1083 = vmatpush2.xpose.msra.mxu0 0.0
    %1084 = vmatprep.subr.mxu0 0.0
    %1085 = vmatpush2.xpose.msra.mxu0 0.0
    %1086 = vmatprep.subr.mxu0 0.0
    %1087 = vmatpush2.xpose.msra.mxu0 0.0
    %1088 = vmatprep.subr.mxu0 0.0
    %1089 = vmatpush2.xpose.msra.mxu0 0.0
    %1090 = vmatprep.subr.mxu0 0.0
    %1091 = vmatpush2.xpose.msra.mxu0 0.0
    %1092 = vmatprep.subr.mxu0 0.0
    %1093 = vmatpush2.xpose.msra.mxu0 0.0
    %1094 = vmatprep.subr.mxu0 0.0
    %1095 = vmatpush2.xpose.msra.mxu0 0.0
    %1096 = vmatprep.subr.mxu0 0.0
    %1097 = vmatpush2.xpose.msra.mxu0 0.0
    %1098 = vmatprep.subr.mxu0 0.0
    %1099 = vmatpush2.xpose.msra.mxu0 0.0
    %1100 = vmatprep.subr.mxu0 0.0
    %1101 = vmatpush2.xpose.msra.mxu0 0.0
    %1102 = vmatprep.subr.mxu0 0.0
    %1103 = vmatpush2.xpose.msra.mxu0 0.0
    %1104 = vmatprep.subr.mxu0 0.0
    %1105 = vmatpush2.xpose.msra.mxu0 0.0
    %1106 = vmatprep.subr.mxu0 0.0
    %1107 = vmatpush2.xpose.msra.mxu0 0.0
    %1108 = vmatprep.subr.mxu0 0.0
    %1109 = vmatpush2.xpose.msra.mxu0 0.0
    %1110 = vmatprep.mubr.f32.mxu0 0.0
    %1111 = vmatmul.mubr.f32.gmra.mxu0 %v157
    %v1112 = vpop.f32.mrf.mxu0
    %v1113 = vadd.f32 0.0, %v1112
    %v1114 = vpop.f32.mrf.mxu0
    %1115 = vmatprep.mubr.f32.mxu0 0.0
    %1116 = vmatmul.mubr.f32.gmra.mxu0 %v157
    %v1117 = vpop.f32.mrf.mxu0
    %v1118 = vadd.f32 0.0, %v1117
    %v1119 = vpop.f32.mrf.mxu0
    %1120 = vdwg.mxu0
    %1121 = vset.pattern.permute.xlu0 32
    %1122 = vperm.xlu0 %1121, %v1028
    %v1123 = vpop.permute.xlu0 %1122
    %1125 = vset.pattern.permute.xlu0 32
    %1126 = vperm.xlu0 %1125, %v1033
    %v1127 = vpop.permute.xlu0 %1126
    %v1129 = vadd.f32 %v1123, %v1113
    %v1130 = vadd.f32 %v1127, %v1118
    %vm1131 = vcmp.gt.f32.partialorder %v1129, 0.0
    %vm1132 = vcmp.gt.f32.partialorder %v1130, 0.0
    %v1133 = vmul.f32 %v1129, 0.2
    %v1134 = vmul.f32 %v1130, 0.2
    %v1135 = vsel %vm1131, %v1129, %v1133
    %v1136 = vsel %vm1132, %v1130, %v1134
    %v1137 = vadd.f32 %v1135, %v59
    %v1138 = vadd.f32 %v1136, %v60
    %v1139 = vsel %vm256, %v1137, -inf
    %1140 = vmax.xlane.f32.xlu0 %v1139
    %v1141 = vpop.xlane.xlu0 %1140
    %v1142 = vsel %vm256, %v1138, -inf
    %1143 = vmax.xlane.f32.xlu0 %v1142
    %v1144 = vpop.xlane.xlu0 %1143
    %v1145 = vsub.f32 %v1137, %v1141
    %v1146 = vsub.f32 %v1138, %v1144
    %v1147 = vmul.f32 %v1145, 1.442695
    %v1148 = vpow.pop %v1147
    %v1149 = vmul.f32 %v1146, 1.442695
    %v1150 = vpow.pop %v1149
    %v1151 = vsel %vm256, %v1148, 0.0
    %1152 = vadd.xlane.f32.xlu0 %v1151
    %v1153 = vpop.xlane.xlu0 %1152
    %v1154 = vsel %vm256, %v1150, 0.0
    %1155 = vadd.xlane.f32.xlu0 %v1154
    %v1156 = vpop.xlane.xlu0 %1155
    %v1157 = vrcp.pop %v1153
    %v1158 = vrcp.pop %v1156
    %v1159 = vmul.f32 %v1148, %v1157
    %v1160 = vmul.f32 %v1150, %v1158
    %v1162 = vsel %vm256, %v1159, 0
    %v1165 = vsel %vm256, %v1160, 0
    %1167 = vmatprep.subr.mxu0 0.0
    %1168 = vmatpush1.msra.mxu0 0.0
    %1169 = vmatprep.subr.mxu0 0.0
    %1170 = vmatpush1.msra.mxu0 0.0
    %1171 = vmatprep.subr.mxu0 0.0
    %1172 = vmatpush1.msra.mxu0 0.0
    %1173 = vmatprep.subr.mxu0 0.0
    %1174 = vmatpush1.msra.mxu0 0.0
    %1175 = vmatprep.subr.mxu0 0.0
    %1176 = vmatpush1.msra.mxu0 0.0
    %1177 = vmatprep.subr.mxu0 0.0
    %1178 = vmatpush1.msra.mxu0 0.0
    %1179 = vmatprep.subr.mxu0 0.0
    %1180 = vmatpush1.msra.mxu0 0.0
    %1181 = vmatprep.subr.mxu0 0.0
    %1182 = vmatpush1.msra.mxu0 0.0
    %1183 = vmatprep.subr.mxu0 0.0
    %1184 = vmatpush1.msra.mxu0 0.0
    %1185 = vmatprep.subr.mxu0 0.0
    %1186 = vmatpush1.msra.mxu0 0.0
    %1187 = vmatprep.subr.mxu0 0.0
    %1188 = vmatpush1.msra.mxu0 0.0
    %1189 = vmatprep.subr.mxu0 0.0
    %1190 = vmatpush1.msra.mxu0 0.0
    %1191 = vmatprep.subr.mxu0 0.0
    %1192 = vmatpush1.msra.mxu0 0.0
    %1193 = vmatprep.subr.mxu0 0.0
    %1194 = vmatpush1.msra.mxu0 0.0
    %1195 = vmatprep.subr.mxu0 0.0
    %1196 = vmatpush1.msra.mxu0 %v1033
    %1197 = vmatprep.subr.mxu0 0.0
    %1198 = vmatpush1.msra.mxu0 %v1028
    %1199 = vmatprep.subr.mxu0 0.0
    %1200 = vmatpush2.msra.mxu0 0.0
    %1201 = vmatprep.subr.mxu0 0.0
    %1202 = vmatpush2.msra.mxu0 0.0
    %1203 = vmatprep.subr.mxu0 0.0
    %1204 = vmatpush2.msra.mxu0 0.0
    %1205 = vmatprep.subr.mxu0 0.0
    %1206 = vmatpush2.msra.mxu0 0.0
    %1207 = vmatprep.subr.mxu0 0.0
    %1208 = vmatpush2.msra.mxu0 0.0
    %1209 = vmatprep.subr.mxu0 0.0
    %1210 = vmatpush2.msra.mxu0 0.0
    %1211 = vmatprep.subr.mxu0 0.0
    %1212 = vmatpush2.msra.mxu0 0.0
    %1213 = vmatprep.subr.mxu0 0.0
    %1214 = vmatpush2.msra.mxu0 0.0
    %1215 = vmatprep.subr.mxu0 0.0
    %1216 = vmatpush2.msra.mxu0 0.0
    %1217 = vmatprep.subr.mxu0 0.0
    %1218 = vmatpush2.msra.mxu0 0.0
    %1219 = vmatprep.subr.mxu0 0.0
    %1220 = vmatpush2.msra.mxu0 0.0
    %1221 = vmatprep.subr.mxu0 0.0
    %1222 = vmatpush2.msra.mxu0 0.0
    %1223 = vmatprep.subr.mxu0 0.0
    %1224 = vmatpush2.msra.mxu0 0.0
    %1225 = vmatprep.subr.mxu0 0.0
    %1226 = vmatpush2.msra.mxu0 0.0
    %1227 = vmatprep.subr.mxu0 0.0
    %1228 = vmatpush2.msra.mxu0 0.0
    %1229 = vmatprep.subr.mxu0 0.0
    %1230 = vmatpush2.msra.mxu0 0.0
    %1231 = vmatprep.mubr.f32.mxu0 0.0
    %1232 = vmatmul.mubr.f32.gmra.mxu0 %v1162
    %v1233 = vpop.f32.mrf.mxu0
    %v1234 = vadd.f32 %v948, %v1233
    %v1235 = vpop.f32.mrf.mxu0
    %1236 = vmatprep.mubr.f32.mxu0 0.0
    %1237 = vmatmul.mubr.f32.gmra.mxu0 %v1165
    %v1238 = vpop.f32.mrf.mxu0
    %v1239 = vadd.f32 %v949, %v1238
    %v1240 = vpop.f32.mrf.mxu0
    %1241 = vdwg.mxu0
    %v1242 = vtanh.pop %v1234
    %v1243 = vtanh.pop %v1239
    %v1244 = vld [vmem:[%s3] sm:$0x3]
    %v1246 = vsel %vm256, %v1244, 0
    %1248 = vmatprep.subr.mxu0 0.0
    %1249 = vmatpush1.msra.mxu0 0.0
    %1250 = vmatprep.subr.mxu0 0.0
    %1251 = vmatpush1.msra.mxu0 0.0
    %1252 = vmatprep.subr.mxu0 0.0
    %1253 = vmatpush1.msra.mxu0 0.0
    %1254 = vmatprep.subr.mxu0 0.0
    %1255 = vmatpush1.msra.mxu0 0.0
    %1256 = vmatprep.subr.mxu0 0.0
    %1257 = vmatpush1.msra.mxu0 0.0
    %1258 = vmatprep.subr.mxu0 0.0
    %1259 = vmatpush1.msra.mxu0 0.0
    %1260 = vmatprep.subr.mxu0 0.0
    %1261 = vmatpush1.msra.mxu0 0.0
    %1262 = vmatprep.subr.mxu0 0.0
    %1263 = vmatpush1.msra.mxu0 0.0
    %1264 = vmatprep.subr.mxu0 0.0
    %1265 = vmatpush1.msra.mxu0 0.0
    %1266 = vmatprep.subr.mxu0 0.0
    %1267 = vmatpush1.msra.mxu0 0.0
    %1268 = vmatprep.subr.mxu0 0.0
    %1269 = vmatpush1.msra.mxu0 0.0
    %1270 = vmatprep.subr.mxu0 0.0
    %1271 = vmatpush1.msra.mxu0 0.0
    %1272 = vmatprep.subr.mxu0 0.0
    %1273 = vmatpush1.msra.mxu0 0.0
    %1274 = vmatprep.subr.mxu0 0.0
    %1275 = vmatpush1.msra.mxu0 0.0
    %1276 = vmatprep.subr.mxu0 0.0
    %1277 = vmatpush1.msra.mxu0 %v1243
    %1278 = vmatprep.subr.mxu0 0.0
    %1279 = vmatpush1.msra.mxu0 %v1242
    %1280 = vmatprep.subr.mxu0 0.0
    %1281 = vmatpush2.msra.mxu0 0.0
    %1282 = vmatprep.subr.mxu0 0.0
    %1283 = vmatpush2.msra.mxu0 0.0
    %1284 = vmatprep.subr.mxu0 0.0
    %1285 = vmatpush2.msra.mxu0 0.0
    %1286 = vmatprep.subr.mxu0 0.0
    %1287 = vmatpush2.msra.mxu0 0.0
    %1288 = vmatprep.subr.mxu0 0.0
    %1289 = vmatpush2.msra.mxu0 0.0
    %1290 = vmatprep.subr.mxu0 0.0
    %1291 = vmatpush2.msra.mxu0 0.0
    %1292 = vmatprep.subr.mxu0 0.0
    %1293 = vmatpush2.msra.mxu0 0.0
    %1294 = vmatprep.subr.mxu0 0.0
    %1295 = vmatpush2.msra.mxu0 0.0
    %1296 = vmatprep.subr.mxu0 0.0
    %1297 = vmatpush2.msra.mxu0 0.0
    %1298 = vmatprep.subr.mxu0 0.0
    %1299 = vmatpush2.msra.mxu0 0.0
    %1300 = vmatprep.subr.mxu0 0.0
    %1301 = vmatpush2.msra.mxu0 0.0
    %1302 = vmatprep.subr.mxu0 0.0
    %1303 = vmatpush2.msra.mxu0 0.0
    %1304 = vmatprep.subr.mxu0 0.0
    %1305 = vmatpush2.msra.mxu0 0.0
    %1306 = vmatprep.subr.mxu0 0.0
    %1307 = vmatpush2.msra.mxu0 0.0
    %1308 = vmatprep.subr.mxu0 0.0
    %1309 = vmatpush2.msra.mxu0 0.0
    %1310 = vmatprep.subr.mxu0 0.0
    %1311 = vmatpush2.msra.mxu0 0.0
    %1312 = vmatprep.mubr.f32.mxu0 0.0
    %1313 = vmatmul.mubr.f32.gmra.mxu0 %v1246
    %v1314 = vpop.f32.mrf.mxu0
    %v1315 = vadd.f32 0.0, %v1314
    %v1316 = vpop.f32.mrf.mxu0
    %1317 = vdwg.mxu0
    %vm1318 = vcmask 254976
    %1319 = vst.msk [vmem:[#allocation8] sm:$0x3] %vm1318, %v1315
    // Predicated region
    $region30: #{tpu_custom_call.1} parent=1 // pred_check
      _
    $region31: #{tpu_custom_call.1} parent=1 // pred_check_branch
      %1321 = sbr.rel (0) target = $region33
    $region32: #{tpu_custom_call.1} parent=1 // pred_region
      %s1323 = ssub.s32 32, 32
      %1324 = vsyncadd [#allocation4], %s1323
      %s1326 = sshll.u32 [#allocation8], 4
      %s1327 = int_to_ptr.vmem [resolvable:$true] %s1326
      %1329 = dma.vmem_to_hbm [thread:$0]  %s1327, 32, %s4, [#allocation4]
    $region33: #{tpu_custom_call.1} parent=1 // pred_fallthru
      _
    // Predicated region
    $region34: #{tpu_custom_call.1} parent=1 // pred_check
      _
    $region35: #{tpu_custom_call.1} parent=1 // pred_check_branch
      %1331 = sbr.rel (0) target = $region37
    $region36: #{tpu_custom_call.1} parent=1 // pred_region
      %1332 = dma.done [#allocation4], 32
    $region37: #{tpu_custom_call.1} parent=1 // pred_fallthru
      _
    %1333 = vsyncpa [#allocation3], 1
    %1334 = vsyncpa [#allocation6], 1
    %1335 = vsyncpa [#allocation4], 1

</llo_original>
